<compile_context>
chip_gen: v7x
topology: tpu7x:2x2x1
jax: 0.10.0
libtpu: 0.0.40
codegen_flags: <defaults>
</compile_context>

<pallas_src>
import functools
import math

import jax
import jax.numpy as jnp
import numpy as np
from jax import lax
from jax.experimental import pallas as pl
from jax.experimental.pallas import tpu as pltpu

K = 7      # conv kernel size
PAD = 3    # conv padding


def _round_up(x, m):
    return (x + m - 1) // m * m


def _pick_c_block(C, HW, itemsize, max_block_bytes):
    """Largest channel tile that divides C, is a multiple of 8 (or all of C),
    and keeps a (c_blk, HW) tile under max_block_bytes."""
    cands = sorted({d for d in range(8, C + 1, 8) if C % d == 0} | {C})
    fitting = [d for d in cands if d * HW * itemsize <= max_block_bytes]
    return fitting[-1] if fitting else cands[0]


def _check_c_block(C, blk, name):
    if C % blk != 0 or not (blk == C or blk % 8 == 0):
        raise ValueError(
            f"{name}={blk} must divide C={C} and be a multiple of 8 (or == C)")


def _vmem_limit(pipelined_bytes, scratch_bytes=0):
    # Pipelined (BlockSpec) buffers are double-buffered; scratch is not.
    need = 2 * int(pipelined_bytes) + int(scratch_bytes) + (4 << 20)
    return int(min(max(need, 16 << 20), 56 << 20))   # fits v5e / v6e / v7x


def _make_dx_masks(H, W):
    """(8, H*W) f32 masks: row dx is 1 where column x + dx - PAD lies in
    [0, W).  These supply the horizontal zero padding of the 7x7 conv when it
    is evaluated on a flat (row-major) layout.  Row 7 is unused padding."""
    x = np.arange(H * W) % W
    m = np.zeros((8, H * W), np.float32)
    for dx in range(K):
        d = dx - PAD
        m[dx] = ((x + d >= 0) & (x + d < W)).astype(np.float32)
    return jnp.asarray(m)


# --------------------------- in-kernel helpers --------------------------------

def _partial_reduce_8(feat_ref, n_rows):
    """Sum / max over channels [0, n_rows) of feat_ref[0], accumulated
    ELEMENTWISE into (8, HW) slabs (identity padded).  The single 8->1
    cross-sublane reduction is deferred to the caller."""
    f32 = jnp.float32
    full = (n_rows // 8) * 8
    ps = pm = None
    for off in range(0, full, 8):
        ch = feat_ref[0, off:off + 8, :].astype(f32)
        ps = ch if ps is None else ps + ch
        pm = ch if pm is None else jnp.maximum(pm, ch)
    if full < n_rows:                                    # remainder (< 8 rows)
        rem = feat_ref[0, full:n_rows, :].astype(f32)
        rs = jnp.sum(rem, axis=0, keepdims=True)
        rm = jnp.max(rem, axis=0, keepdims=True)
        hw = rs.shape[-1]
        row0 = lax.broadcasted_iota(jnp.int32, (8, hw), 0) == 0
        rs8 = jnp.where(row0, rs, f32(0.0))
        rm8 = jnp.where(row0, rm, f32(-jnp.inf))
        ps = rs8 if ps is None else ps + rs8
        pm = rm8 if pm is None else jnp.maximum(pm, rm8)
    return ps, pm


def _conv7x7_sigmoid_flat(w_ref, avg, mx, mask_ref, pad_a, pad_m, *, H, W):
    """sigmoid(conv2d([avg; mx], w, pad=3, no bias)) on the flat row-major
    layout.  Each tap is a statically lane-shifted slice of a zero-padded
    buffer; per-dx column masks provide the horizontal zero padding."""
    HW = H * W
    base = PAD * W + PAD            # start of valid data inside the pad buffer
    # Re-zero the halo EVERY call so "parallel" grids (megacore) stay correct.
    pad_a[...] = jnp.zeros_like(pad_a)
    pad_m[...] = jnp.zeros_like(pad_m)
    pad_a[:, base:base + HW] = avg
    pad_m[:, base:base + HW] = mx

    acc = None
    for dx in range(K):
        part = None
        for c, pref in enumerate((pad_a, pad_m)):
            for dy in range(K):
                s = base + (dy - PAD) * W + (dx - PAD)
                w = w_ref[c * K * K + dy * K + dx]        # f32 scalar from SMEM
                term = w * pref[:, s:s + HW]
                part = term if part is None else part + term
        part = part * mask_ref[dx:dx + 1, :]
        acc = part if acc is None else acc + part
    return jax.nn.sigmoid(acc)                            # (1, HW) f32


def _apply_chunked(feat_ref, att, out_ref, n_rows):
    """out[0, :n_rows] = feat[0, :n_rows] * att, in 8-row chunks so the f32
    intermediates stay bounded regardless of the block size."""
    f32 = jnp.float32
    for off in range(0, n_rows, 8):
        sz = min(8, n_rows - off)
        blk = feat_ref[0, off:off + sz, :].astype(f32) * att
        out_ref[0, off:off + sz, :] = blk.astype(out_ref.dtype)


# --------------------------- fused single-pass kernel -------------------------

def _fused_impl(w_ref, feat_ref, mask_ref, gt_ref, out_ref, pad_a, pad_m,
                *, C, H, W):
    f32 = jnp.float32
    s8, m8 = _partial_reduce_8(feat_ref, C)
    avg = jnp.sum(s8, axis=0, keepdims=True) * f32(1.0 / C)   # (1, HW)
    mx = jnp.max(m8, axis=0, keepdims=True)                   # (1, HW)
    att = _conv7x7_sigmoid_flat(w_ref, avg, mx, mask_ref, pad_a, pad_m, H=H, W=W)
    if gt_ref is not None:
        att = att * gt_ref[0].astype(f32)
    _apply_chunked(feat_ref, att, out_ref, C)


def _fused_kernel_nogt(w_ref, feat_ref, mask_ref, out_ref, pad_a, pad_m,
                       *, C, H, W):
    _fused_impl(w_ref, feat_ref, mask_ref, None, out_ref, pad_a, pad_m,
                C=C, H=H, W=W)


def _fused_kernel_gt(w_ref, feat_ref, mask_ref, gt_ref, out_ref, pad_a, pad_m,
                     *, C, H, W):
    _fused_impl(w_ref, feat_ref, mask_ref, gt_ref, out_ref, pad_a, pad_m,
                C=C, H=H, W=W)


# --------------------------- fallback pass 1: reduce + conv -------------------

def _reduce_conv_impl(w_ref, feat_ref, mask_ref, gt_ref, att_ref,
                      sum8_ref, max8_ref, pad_a, pad_m, *, c_block, C, H, W):
    f32 = jnp.float32
    ci = pl.program_id(1)
    ps, pm = _partial_reduce_8(feat_ref, c_block)

    @pl.when(ci == 0)
    def _():
        sum8_ref[...] = ps
        max8_ref[...] = pm

    @pl.when(ci > 0)
    def _():
        sum8_ref[...] = sum8_ref[...] + ps
        max8_ref[...] = jnp.maximum(max8_ref[...], pm)

    @pl.when(ci == pl.num_programs(1) - 1)
    def _():
        avg = jnp.sum(sum8_ref[...], axis=0, keepdims=True) * f32(1.0 / C)
        mx = jnp.max(max8_ref[...], axis=0, keepdims=True)
        att = _conv7x7_sigmoid_flat(w_ref, avg, mx, mask_ref, pad_a, pad_m,
                                    H=H, W=W)
        if gt_ref is not None:
            att = att * gt_ref[0].astype(f32)
        att_ref[0] = att.astype(att_ref.dtype)


def _reduce_conv_kernel_nogt(w_ref, feat_ref, mask_ref, att_ref,
                             sum8_ref, max8_ref, pad_a, pad_m,
                             *, c_block, C, H, W):
    _reduce_conv_impl(w_ref, feat_ref, mask_ref, None, att_ref,
                      sum8_ref, max8_ref, pad_a, pad_m,
                      c_block=c_block, C=C, H=H, W=W)


def _reduce_conv_kernel_gt(w_ref, feat_ref, mask_ref, gt_ref, att_ref,
                           sum8_ref, max8_ref, pad_a, pad_m,
                           *, c_block, C, H, W):
    _reduce_conv_impl(w_ref, feat_ref, mask_ref, gt_ref, att_ref,
                      sum8_ref, max8_ref, pad_a, pad_m,
                      c_block=c_block, C=C, H=H, W=W)


# --------------------------- fallback pass 2: apply ---------------------------

def _apply_kernel(feat_ref, att_ref, out_ref, *, c_block):
    att = att_ref[0].astype(jnp.float32)                 # (1, HW)
    _apply_chunked(feat_ref, att, out_ref, c_block)


# --------------------------- wrapper ------------------------------------------

def spatial_attention(feature_map, conv_weight, gt_heatmap=None, *,
                      fuse=None, reduce_c_block=None, apply_c_block=None):
    """feature_map: (N, C, H, W) float (f32/bf16/f16); conv_weight: (1, 2, 7, 7)
    OIHW; gt_heatmap: optional (N, 1, H, W).  Returns (N, C, H, W) in
    feature_map.dtype."""
    N, C, H, W = feature_map.shape
    HW = H * W
    f32 = jnp.float32
    in_dt = feature_map.dtype
    in_isz = feature_map.dtype.itemsize

    feat2d = feature_map.reshape(N, C, HW)               # free, native dtype
    w_flat = conv_weight.astype(f32).reshape(-1)         # (2*7*7,) -> SMEM prefetch
    masks = _make_dx_masks(H, W)                         # (8, HW) f32, tiny
    gt2d = None if gt_heatmap is None else gt_heatmap.reshape(N, 1, HW)
    gt_isz = 0 if gt_heatmap is None else gt_heatmap.dtype.itemsize

    # flat padded conv buffer: 3 zero rows above + data + 3 zero rows below +
    # 3-element guards on each side, rounded to the lane tile.
    pad_len = _round_up(HW + 2 * PAD * W + 2 * PAD, 128)
    pad_scratch = 2 * 8 * pad_len * 4                    # two (1,pad_len) f32 bufs

    # ------- fully fused single pass (when the per-batch slab fits VMEM) -----
    slab = C * HW * 2 * in_isz                           # feat in + out blocks
    extras = 8 * HW * 4 + HW * gt_isz                    # masks + gt blocks
    fused_need = 2 * (slab + extras) + pad_scratch + (4 << 20)
    if fuse is None:
        fuse = fused_need <= (40 << 20)                  # conservative: v7x 64 MiB

    if fuse:
        in_specs = [pl.BlockSpec((1, C, HW), lambda n, w: (n, 0, 0)),
                    pl.BlockSpec((8, HW), lambda n, w: (0, 0))]
        args = [feat2d, masks]
        if gt2d is None:
            kern = functools.partial(_fused_kernel_nogt, C=C, H=H, W=W)
        else:
            kern = functools.partial(_fused_kernel_gt, C=C, H=H, W=W)
            in_specs.append(pl.BlockSpec((1, 1, HW), lambda n, w: (n, 0, 0)))
            args.append(gt2d)
        out2d = pl.pallas_call(
            kern,
            out_shape=jax.ShapeDtypeStruct((N, C, HW), in_dt),
            grid_spec=pltpu.PrefetchScalarGridSpec(
                num_scalar_prefetch=1,                   # conv weights -> SMEM
                grid=(N,),
                in_specs=in_specs,
                out_specs=pl.BlockSpec((1, C, HW), lambda n, w: (n, 0, 0)),
                scratch_shapes=[pltpu.VMEM((1, pad_len), f32),
                                pltpu.VMEM((1, pad_len), f32)],
            ),
            compiler_params=pltpu.CompilerParams(
                dimension_semantics=("parallel",),
                vmem_limit_bytes=_vmem_limit(slab + extras, pad_scratch),
            ),
        )(w_flat, *args)
        return out2d.reshape(N, C, H, W)

    # ------- fallback: (reduce + conv) pass, then fully parallel apply -------
    c_blk_r = (reduce_c_block if reduce_c_block is not None
               else _pick_c_block(C, HW, in_isz, 8 << 20))
    c_blk_a = (apply_c_block if apply_c_block is not None
               else _pick_c_block(C, HW, in_isz, 8 << 20))
    _check_c_block(C, c_blk_r, "reduce_c_block")
    _check_c_block(C, c_blk_a, "apply_c_block")

    rc_in_specs = [pl.BlockSpec((1, c_blk_r, HW), lambda n, c, w: (n, c, 0)),
                   pl.BlockSpec((8, HW), lambda n, c, w: (0, 0))]
    rc_args = [feat2d, masks]
    if gt2d is None:
        rc_kern = functools.partial(_reduce_conv_kernel_nogt,
                                    c_block=c_blk_r, C=C, H=H, W=W)
    else:
        rc_kern = functools.partial(_reduce_conv_kernel_gt,
                                    c_block=c_blk_r, C=C, H=H, W=W)
        rc_in_specs.append(pl.BlockSpec((1, 1, HW), lambda n, c, w: (n, 0, 0)))
        rc_args.append(gt2d)

    rc_pipelined = c_blk_r * HW * in_isz + 8 * HW * 4 + HW * gt_isz + HW * 4
    rc_scratch = 2 * 8 * HW * 4 + pad_scratch
    att = pl.pallas_call(
        rc_kern,
        out_shape=jax.ShapeDtypeStruct((N, 1, HW), f32),
        grid_spec=pltpu.PrefetchScalarGridSpec(
            num_scalar_prefetch=1,                       # conv weights -> SMEM
            grid=(N, C // c_blk_r),
            in_specs=rc_in_specs,
            out_specs=pl.BlockSpec((1, 1, HW), lambda n, c, w: (n, 0, 0)),
            scratch_shapes=[pltpu.VMEM((8, HW), f32), pltpu.VMEM((8, HW), f32),
                            pltpu.VMEM((1, pad_len), f32),
                            pltpu.VMEM((1, pad_len), f32)],
        ),
        compiler_params=pltpu.CompilerParams(
            dimension_semantics=("parallel", "arbitrary"),
            vmem_limit_bytes=_vmem_limit(rc_pipelined, rc_scratch),
        ),
    )(w_flat, *rc_args)

    ap_pipelined = c_blk_a * HW * 2 * in_isz + HW * 4
    out2d = pl.pallas_call(
        functools.partial(_apply_kernel, c_block=c_blk_a),
        out_shape=jax.ShapeDtypeStruct((N, C, HW), in_dt),
        grid_spec=pltpu.PrefetchScalarGridSpec(
            num_scalar_prefetch=0,
            grid=(N, C // c_blk_a),
            in_specs=[pl.BlockSpec((1, c_blk_a, HW), lambda n, c: (n, c, 0)),
                      pl.BlockSpec((1, 1, HW), lambda n, c: (n, 0, 0))],
            out_specs=pl.BlockSpec((1, c_blk_a, HW), lambda n, c: (n, c, 0)),
        ),
        compiler_params=pltpu.CompilerParams(
            dimension_semantics=("parallel", "parallel"),
            vmem_limit_bytes=_vmem_limit(ap_pipelined),
        ),
    )(feat2d, att)

    return out2d.reshape(N, C, H, W)


# --------------------------- pure-JAX reference --------------------------------

def reference(feature_map, conv_weight, gt_heatmap=None):
    """Pure-JAX reference mirroring the PyTorch forward (NCHW, OIHW)."""
    feature_map = feature_map.astype(jnp.float32)
    avg = jnp.mean(feature_map, axis=1, keepdims=True)
    mx = jnp.max(feature_map, axis=1, keepdims=True)
    x = jnp.concatenate([avg, mx], axis=1)
    y = lax.conv_general_dilated(
        x, conv_weight.astype(jnp.float32), window_strides=(1, 1),
        padding=((PAD, PAD), (PAD, PAD)),
        dimension_numbers=("NCHW", "OIHW", "NCHW"))
    att = jax.nn.sigmoid(y)
    if gt_heatmap is not None:
        att = att * gt_heatmap.astype(jnp.float32)
    return feature_map * att


if __name__ == "__main__":
    key = jax.random.PRNGKey(0)
    k_feat, k_w, k_gt = jax.random.split(key, 3)

    N, C, H, W = 2, 16, 16, 16
    feature_map = jax.random.normal(k_feat, (N, C, H, W), dtype=jnp.float32)

    # Deterministic conv1 weight (kaiming-ish scale), (1, 2, 7, 7), no bias.
    fan_in = 2 * K * K
    conv_weight = (jax.random.normal(k_w, (1, 2, K, K), dtype=jnp.float32)
                   / math.sqrt(fan_in))
    gt_heatmap = jax.nn.sigmoid(
        jax.random.normal(k_gt, (N, 1, H, W), dtype=jnp.float32))

    # 1) fused single-pass path (default), no gt_heatmap, f32.
    out = jax.block_until_ready(spatial_attention(feature_map, conv_weight))
    np.testing.assert_allclose(np.asarray(out),
                               np.asarray(reference(feature_map, conv_weight)),
                               rtol=1e-4, atol=2e-5)

    # 2) forced 2-pass fallback + gt_heatmap + explicit small C tiles
    #    (exercises the cross-step scratch accumulation and the parallel apply).
    out2 = jax.block_until_ready(
        spatial_attention(feature_map, conv_weight, gt_heatmap,
                          fuse=False, reduce_c_block=8, apply_c_block=8))
    np.testing.assert_allclose(
        np.asarray(out2),
        np.asarray(reference(feature_map, conv_weight, gt_heatmap)),
        rtol=1e-4, atol=2e-5)

    # 3) bf16 end-to-end (native-dtype DMA, in-kernel f32 math, bf16 output).
    fm_bf16 = feature_map.astype(jnp.bfloat16)
    gt_bf16 = gt_heatmap.astype(jnp.bfloat16)
    out3 = jax.block_until_ready(spatial_attention(fm_bf16, conv_weight, gt_bf16))
    np.testing.assert_allclose(
        np.asarray(out3.astype(jnp.float32)),
        np.asarray(reference(fm_bf16, conv_weight, gt_bf16)),
        rtol=2e-2, atol=2e-2)

    # 4) odd channel count (C not a multiple of 8) through the fused path,
    #    exercising the identity-padded remainder handling of the reduce.
    N4, C4, H4, W4 = 1, 12, 8, 8
    fm4 = jax.random.normal(k_feat, (N4, C4, H4, W4), dtype=jnp.float32)
    out4 = jax.block_until_ready(spatial_attention(fm4, conv_weight))
    np.testing.assert_allclose(np.asarray(out4),
                               np.asarray(reference(fm4, conv_weight)),
                               rtol=1e-4, atol=2e-5)

    print("KERNEL_OK")
</pallas_src>

<mosaic_0001>
module attributes {stable_mosaic.version = 11 : i64} {
  func.func @_fused_kernel_nogt(%arg0: i32, %arg1: memref<98xf32, #tpu.memory_space<smem>>, %arg2: memref<1x16x256xf32, #tpu.memory_space<vmem>>, %arg3: memref<8x256xf32, #tpu.memory_space<vmem>>, %arg4: memref<1x16x256xf32, #tpu.memory_space<vmem>>, %arg5: memref<1x384xf32, #tpu.memory_space<vmem>>, %arg6: memref<1x384xf32, #tpu.memory_space<vmem>>) attributes {dimension_semantics = [#tpu.dimension_semantics<parallel>], iteration_bounds = array<i64: 2>, scalar_prefetch = 1 : i64, scratch_operands = 2 : i64, tpu.core_type = #tpu.core_type<tc>, window_params = [{transform_indices = @transform_0, window_bounds = array<i64: 1, 16, 256>}, {pipeline_mode = #tpu.pipeline_mode<synchronous>, transform_indices = @transform_1, window_bounds = array<i64: 8, 256>}, {transform_indices = @transform_2, window_bounds = array<i64: 1, 16, 256>}]} {
    %c0 = arith.constant 0 : index
    %c0_0 = arith.constant 0 : index
    %c0_1 = arith.constant 0 : index
    %0 = vector.load %arg2[%c0, %c0_0, %c0_1] : memref<1x16x256xf32, #tpu.memory_space<vmem>>, vector<1x8x256xf32>
    %1 = vector.shape_cast %0 : vector<1x8x256xf32> to vector<8x256xf32>
    %c0_2 = arith.constant 0 : index
    %c8 = arith.constant 8 : index
    %c0_3 = arith.constant 0 : index
    %2 = vector.load %arg2[%c0_2, %c8, %c0_3] : memref<1x16x256xf32, #tpu.memory_space<vmem>>, vector<1x8x256xf32>
    %3 = vector.shape_cast %2 : vector<1x8x256xf32> to vector<8x256xf32>
    %4 = arith.addf %1, %3 : vector<8x256xf32>
    %5 = arith.maximumf %1, %3 : vector<8x256xf32>
    %cst = arith.constant dense<0.000000e+00> : vector<256xf32>
    %6 = vector.multi_reduction <add>, %4, %cst [0] : vector<8x256xf32> to vector<256xf32>
    %7 = vector.shape_cast %6 : vector<256xf32> to vector<1x256xf32>
    %cst_4 = arith.constant 6.250000e-02 : f32
    %8 = vector.broadcast %cst_4 : f32 to vector<1x256xf32>
    %9 = arith.mulf %7, %8 : vector<1x256xf32>
    %cst_5 = arith.constant dense<0xFF800000> : vector<256xf32>
    %10 = vector.multi_reduction <maximumf>, %5, %cst_5 [0] : vector<8x256xf32> to vector<256xf32>
    %11 = vector.shape_cast %10 : vector<256xf32> to vector<1x256xf32>
    %cst_6 = arith.constant 0.000000e+00 : f32
    %12 = vector.broadcast %cst_6 : f32 to vector<1x384xf32>
    %c0_7 = arith.constant 0 : index
    %c0_8 = arith.constant 0 : index
    %13 = vector.load %arg5[%c0_7, %c0_8] : memref<1x384xf32, #tpu.memory_space<vmem>>, vector<1x384xf32>
    tpu.vector_store %arg5[%c0_7, %c0_8], %12 {strides = array<i32>} : memref<1x384xf32, #tpu.memory_space<vmem>>, vector<1x384xf32>,
    %cst_9 = arith.constant 0.000000e+00 : f32
    %14 = vector.broadcast %cst_9 : f32 to vector<1x384xf32>
    %c0_10 = arith.constant 0 : index
    %c0_11 = arith.constant 0 : index
    %15 = vector.load %arg6[%c0_10, %c0_11] : memref<1x384xf32, #tpu.memory_space<vmem>>, vector<1x384xf32>
    tpu.vector_store %arg6[%c0_10, %c0_11], %14 {strides = array<i32>} : memref<1x384xf32, #tpu.memory_space<vmem>>, vector<1x384xf32>,
    %c0_12 = arith.constant 0 : index
    %c51 = arith.constant 51 : index
    %16 = vector.load %arg5[%c0_12, %c51] : memref<1x384xf32, #tpu.memory_space<vmem>>, vector<1x256xf32>
    tpu.vector_store %arg5[%c0_12, %c51], %9 {strides = array<i32>} : memref<1x384xf32, #tpu.memory_space<vmem>>, vector<1x256xf32>,
    %c0_13 = arith.constant 0 : index
    %c51_14 = arith.constant 51 : index
    %17 = vector.load %arg6[%c0_13, %c51_14] : memref<1x384xf32, #tpu.memory_space<vmem>>, vector<1x256xf32>
    tpu.vector_store %arg6[%c0_13, %c51_14], %11 {strides = array<i32>} : memref<1x384xf32, #tpu.memory_space<vmem>>, vector<1x256xf32>,
    %c0_15 = arith.constant 0 : index
    %18 = memref.load %arg1[%c0_15] : memref<98xf32, #tpu.memory_space<smem>>
    %c0_16 = arith.constant 0 : index
    %c0_17 = arith.constant 0 : index
    %19 = vector.load %arg5[%c0_16, %c0_17] : memref<1x384xf32, #tpu.memory_space<vmem>>, vector<1x256xf32>
    %20 = vector.broadcast %18 : f32 to vector<1x256xf32>
    %21 = arith.mulf %20, %19 : vector<1x256xf32>
    %c7 = arith.constant 7 : index
    %22 = memref.load %arg1[%c7] : memref<98xf32, #tpu.memory_space<smem>>
    %c0_18 = arith.constant 0 : index
    %c16 = arith.constant 16 : index
    %23 = vector.load %arg5[%c0_18, %c16] : memref<1x384xf32, #tpu.memory_space<vmem>>, vector<1x256xf32>
    %24 = vector.broadcast %22 : f32 to vector<1x256xf32>
    %25 = arith.mulf %24, %23 : vector<1x256xf32>
    %26 = arith.addf %21, %25 : vector<1x256xf32>
    %c14 = arith.constant 14 : index
    %27 = memref.load %arg1[%c14] : memref<98xf32, #tpu.memory_space<smem>>
    %c0_19 = arith.constant 0 : index
    %c32 = arith.constant 32 : index
    %28 = vector.load %arg5[%c0_19, %c32] : memref<1x384xf32, #tpu.memory_space<vmem>>, vector<1x256xf32>
    %29 = vector.broadcast %27 : f32 to vector<1x256xf32>
    %30 = arith.mulf %29, %28 : vector<1x256xf32>
    %31 = arith.addf %26, %30 : vector<1x256xf32>
    %c21 = arith.constant 21 : index
    %32 = memref.load %arg1[%c21] : memref<98xf32, #tpu.memory_space<smem>>
    %c0_20 = arith.constant 0 : index
    %c48 = arith.constant 48 : index
    %33 = vector.load %arg5[%c0_20, %c48] : memref<1x384xf32, #tpu.memory_space<vmem>>, vector<1x256xf32>
    %34 = vector.broadcast %32 : f32 to vector<1x256xf32>
    %35 = arith.mulf %34, %33 : vector<1x256xf32>
    %36 = arith.addf %31, %35 : vector<1x256xf32>
    %c28 = arith.constant 28 : index
    %37 = memref.load %arg1[%c28] : memref<98xf32, #tpu.memory_space<smem>>
    %c0_21 = arith.constant 0 : index
    %c64 = arith.constant 64 : index
    %38 = vector.load %arg5[%c0_21, %c64] : memref<1x384xf32, #tpu.memory_space<vmem>>, vector<1x256xf32>
    %39 = vector.broadcast %37 : f32 to vector<1x256xf32>
    %40 = arith.mulf %39, %38 : vector<1x256xf32>
    %41 = arith.addf %36, %40 : vector<1x256xf32>
    %c35 = arith.constant 35 : index
    %42 = memref.load %arg1[%c35] : memref<98xf32, #tpu.memory_space<smem>>
    %c0_22 = arith.constant 0 : index
    %c80 = arith.constant 80 : index
    %43 = vector.load %arg5[%c0_22, %c80] : memref<1x384xf32, #tpu.memory_space<vmem>>, vector<1x256xf32>
    %44 = vector.broadcast %42 : f32 to vector<1x256xf32>
    %45 = arith.mulf %44, %43 : vector<1x256xf32>
    %46 = arith.addf %41, %45 : vector<1x256xf32>
    %c42 = arith.constant 42 : index
    %47 = memref.load %arg1[%c42] : memref<98xf32, #tpu.memory_space<smem>>
    %c0_23 = arith.constant 0 : index
    %c96 = arith.constant 96 : index
    %48 = vector.load %arg5[%c0_23, %c96] : memref<1x384xf32, #tpu.memory_space<vmem>>, vector<1x256xf32>
    %49 = vector.broadcast %47 : f32 to vector<1x256xf32>
    %50 = arith.mulf %49, %48 : vector<1x256xf32>
    %51 = arith.addf %46, %50 : vector<1x256xf32>
    %c49 = arith.constant 49 : index
    %52 = memref.load %arg1[%c49] : memref<98xf32, #tpu.memory_space<smem>>
    %c0_24 = arith.constant 0 : index
    %c0_25 = arith.constant 0 : index
    %53 = vector.load %arg6[%c0_24, %c0_25] : memref<1x384xf32, #tpu.memory_space<vmem>>, vector<1x256xf32>
    %54 = vector.broadcast %52 : f32 to vector<1x256xf32>
    %55 = arith.mulf %54, %53 : vector<1x256xf32>
    %56 = arith.addf %51, %55 : vector<1x256xf32>
    %c56 = arith.constant 56 : index
    %57 = memref.load %arg1[%c56] : memref<98xf32, #tpu.memory_space<smem>>
    %c0_26 = arith.constant 0 : index
    %c16_27 = arith.constant 16 : index
    %58 = vector.load %arg6[%c0_26, %c16_27] : memref<1x384xf32, #tpu.memory_space<vmem>>, vector<1x256xf32>
    %59 = vector.broadcast %57 : f32 to vector<1x256xf32>
    %60 = arith.mulf %59, %58 : vector<1x256xf32>
    %61 = arith.addf %56, %60 : vector<1x256xf32>
    %c63 = arith.constant 63 : index
    %62 = memref.load %arg1[%c63] : memref<98xf32, #tpu.memory_space<smem>>
    %c0_28 = arith.constant 0 : index
    %c32_29 = arith.constant 32 : index
    %63 = vector.load %arg6[%c0_28, %c32_29] : memref<1x384xf32, #tpu.memory_space<vmem>>, vector<1x256xf32>
    %64 = vector.broadcast %62 : f32 to vector<1x256xf32>
    %65 = arith.mulf %64, %63 : vector<1x256xf32>
    %66 = arith.addf %61, %65 : vector<1x256xf32>
    %c70 = arith.constant 70 : index
    %67 = memref.load %arg1[%c70] : memref<98xf32, #tpu.memory_space<smem>>
    %c0_30 = arith.constant 0 : index
    %c48_31 = arith.constant 48 : index
    %68 = vector.load %arg6[%c0_30, %c48_31] : memref<1x384xf32, #tpu.memory_space<vmem>>, vector<1x256xf32>
    %69 = vector.broadcast %67 : f32 to vector<1x256xf32>
    %70 = arith.mulf %69, %68 : vector<1x256xf32>
    %71 = arith.addf %66, %70 : vector<1x256xf32>
    %c77 = arith.constant 77 : index
    %72 = memref.load %arg1[%c77] : memref<98xf32, #tpu.memory_space<smem>>
    %c0_32 = arith.constant 0 : index
    %c64_33 = arith.constant 64 : index
    %73 = vector.load %arg6[%c0_32, %c64_33] : memref<1x384xf32, #tpu.memory_space<vmem>>, vector<1x256xf32>
    %74 = vector.broadcast %72 : f32 to vector<1x256xf32>
    %75 = arith.mulf %74, %73 : vector<1x256xf32>
    %76 = arith.addf %71, %75 : vector<1x256xf32>
    %c84 = arith.constant 84 : index
    %77 = memref.load %arg1[%c84] : memref<98xf32, #tpu.memory_space<smem>>
    %c0_34 = arith.constant 0 : index
    %c80_35 = arith.constant 80 : index
    %78 = vector.load %arg6[%c0_34, %c80_35] : memref<1x384xf32, #tpu.memory_space<vmem>>, vector<1x256xf32>
    %79 = vector.broadcast %77 : f32 to vector<1x256xf32>
    %80 = arith.mulf %79, %78 : vector<1x256xf32>
    %81 = arith.addf %76, %80 : vector<1x256xf32>
    %c91 = arith.constant 91 : index
    %82 = memref.load %arg1[%c91] : memref<98xf32, #tpu.memory_space<smem>>
    %c0_36 = arith.constant 0 : index
    %c96_37 = arith.constant 96 : index
    %83 = vector.load %arg6[%c0_36, %c96_37] : memref<1x384xf32, #tpu.memory_space<vmem>>, vector<1x256xf32>
    %84 = vector.broadcast %82 : f32 to vector<1x256xf32>
    %85 = arith.mulf %84, %83 : vector<1x256xf32>
    %86 = arith.addf %81, %85 : vector<1x256xf32>
    %c0_38 = arith.constant 0 : index
    %c0_39 = arith.constant 0 : index
    %87 = vector.load %arg3[%c0_38, %c0_39] : memref<8x256xf32, #tpu.memory_space<vmem>>, vector<1x256xf32>
    %88 = arith.mulf %86, %87 : vector<1x256xf32>
    %c1 = arith.constant 1 : index
    %89 = memref.load %arg1[%c1] : memref<98xf32, #tpu.memory_space<smem>>
    %c0_40 = arith.constant 0 : index
    %c1_41 = arith.constant 1 : index
    %90 = vector.load %arg5[%c0_40, %c1_41] : memref<1x384xf32, #tpu.memory_space<vmem>>, vector<1x256xf32>
    %91 = vector.broadcast %89 : f32 to vector<1x256xf32>
    %92 = arith.mulf %91, %90 : vector<1x256xf32>
    %c8_42 = arith.constant 8 : index
    %93 = memref.load %arg1[%c8_42] : memref<98xf32, #tpu.memory_space<smem>>
    %c0_43 = arith.constant 0 : index
    %c17 = arith.constant 17 : index
    %94 = vector.load %arg5[%c0_43, %c17] : memref<1x384xf32, #tpu.memory_space<vmem>>, vector<1x256xf32>
    %95 = vector.broadcast %93 : f32 to vector<1x256xf32>
    %96 = arith.mulf %95, %94 : vector<1x256xf32>
    %97 = arith.addf %92, %96 : vector<1x256xf32>
    %c15 = arith.constant 15 : index
    %98 = memref.load %arg1[%c15] : memref<98xf32, #tpu.memory_space<smem>>
    %c0_44 = arith.constant 0 : index
    %c33 = arith.constant 33 : index
    %99 = vector.load %arg5[%c0_44, %c33] : memref<1x384xf32, #tpu.memory_space<vmem>>, vector<1x256xf32>
    %100 = vector.broadcast %98 : f32 to vector<1x256xf32>
    %101 = arith.mulf %100, %99 : vector<1x256xf32>
    %102 = arith.addf %97, %101 : vector<1x256xf32>
    %c22 = arith.constant 22 : index
    %103 = memref.load %arg1[%c22] : memref<98xf32, #tpu.memory_space<smem>>
    %c0_45 = arith.constant 0 : index
    %c49_46 = arith.constant 49 : index
    %104 = vector.load %arg5[%c0_45, %c49_46] : memref<1x384xf32, #tpu.memory_space<vmem>>, vector<1x256xf32>
    %105 = vector.broadcast %103 : f32 to vector<1x256xf32>
    %106 = arith.mulf %105, %104 : vector<1x256xf32>
    %107 = arith.addf %102, %106 : vector<1x256xf32>
    %c29 = arith.constant 29 : index
    %108 = memref.load %arg1[%c29] : memref<98xf32, #tpu.memory_space<smem>>
    %c0_47 = arith.constant 0 : index
    %c65 = arith.constant 65 : index
    %109 = vector.load %arg5[%c0_47, %c65] : memref<1x384xf32, #tpu.memory_space<vmem>>, vector<1x256xf32>
    %110 = vector.broadcast %108 : f32 to vector<1x256xf32>
    %111 = arith.mulf %110, %109 : vector<1x256xf32>
    %112 = arith.addf %107, %111 : vector<1x256xf32>
    %c36 = arith.constant 36 : index
    %113 = memref.load %arg1[%c36] : memref<98xf32, #tpu.memory_space<smem>>
    %c0_48 = arith.constant 0 : index
    %c81 = arith.constant 81 : index
    %114 = vector.load %arg5[%c0_48, %c81] : memref<1x384xf32, #tpu.memory_space<vmem>>, vector<1x256xf32>
    %115 = vector.broadcast %113 : f32 to vector<1x256xf32>
    %116 = arith.mulf %115, %114 : vector<1x256xf32>
    %117 = arith.addf %112, %116 : vector<1x256xf32>
    %c43 = arith.constant 43 : index
    %118 = memref.load %arg1[%c43] : memref<98xf32, #tpu.memory_space<smem>>
    %c0_49 = arith.constant 0 : index
    %c97 = arith.constant 97 : index
    %119 = vector.load %arg5[%c0_49, %c97] : memref<1x384xf32, #tpu.memory_space<vmem>>, vector<1x256xf32>
    %120 = vector.broadcast %118 : f32 to vector<1x256xf32>
    %121 = arith.mulf %120, %119 : vector<1x256xf32>
    %122 = arith.addf %117, %121 : vector<1x256xf32>
    %c50 = arith.constant 50 : index
    %123 = memref.load %arg1[%c50] : memref<98xf32, #tpu.memory_space<smem>>
    %c0_50 = arith.constant 0 : index
    %c1_51 = arith.constant 1 : index
    %124 = vector.load %arg6[%c0_50, %c1_51] : memref<1x384xf32, #tpu.memory_space<vmem>>, vector<1x256xf32>
    %125 = vector.broadcast %123 : f32 to vector<1x256xf32>
    %126 = arith.mulf %125, %124 : vector<1x256xf32>
    %127 = arith.addf %122, %126 : vector<1x256xf32>
    %c57 = arith.constant 57 : index
    %128 = memref.load %arg1[%c57] : memref<98xf32, #tpu.memory_space<smem>>
    %c0_52 = arith.constant 0 : index
    %c17_53 = arith.constant 17 : index
    %129 = vector.load %arg6[%c0_52, %c17_53] : memref<1x384xf32, #tpu.memory_space<vmem>>, vector<1x256xf32>
    %130 = vector.broadcast %128 : f32 to vector<1x256xf32>
    %131 = arith.mulf %130, %129 : vector<1x256xf32>
    %132 = arith.addf %127, %131 : vector<1x256xf32>
    %c64_54 = arith.constant 64 : index
    %133 = memref.load %arg1[%c64_54] : memref<98xf32, #tpu.memory_space<smem>>
    %c0_55 = arith.constant 0 : index
    %c33_56 = arith.constant 33 : index
    %134 = vector.load %arg6[%c0_55, %c33_56] : memref<1x384xf32, #tpu.memory_space<vmem>>, vector<1x256xf32>
    %135 = vector.broadcast %133 : f32 to vector<1x256xf32>
    %136 = arith.mulf %135, %134 : vector<1x256xf32>
    %137 = arith.addf %132, %136 : vector<1x256xf32>
    %c71 = arith.constant 71 : index
    %138 = memref.load %arg1[%c71] : memref<98xf32, #tpu.memory_space<smem>>
    %c0_57 = arith.constant 0 : index
    %c49_58 = arith.constant 49 : index
    %139 = vector.load %arg6[%c0_57, %c49_58] : memref<1x384xf32, #tpu.memory_space<vmem>>, vector<1x256xf32>
    %140 = vector.broadcast %138 : f32 to vector<1x256xf32>
    %141 = arith.mulf %140, %139 : vector<1x256xf32>
    %142 = arith.addf %137, %141 : vector<1x256xf32>
    %c78 = arith.constant 78 : index
    %143 = memref.load %arg1[%c78] : memref<98xf32, #tpu.memory_space<smem>>
    %c0_59 = arith.constant 0 : index
    %c65_60 = arith.constant 65 : index
    %144 = vector.load %arg6[%c0_59, %c65_60] : memref<1x384xf32, #tpu.memory_space<vmem>>, vector<1x256xf32>
    %145 = vector.broadcast %143 : f32 to vector<1x256xf32>
    %146 = arith.mulf %145, %144 : vector<1x256xf32>
    %147 = arith.addf %142, %146 : vector<1x256xf32>
    %c85 = arith.constant 85 : index
    %148 = memref.load %arg1[%c85] : memref<98xf32, #tpu.memory_space<smem>>
    %c0_61 = arith.constant 0 : index
    %c81_62 = arith.constant 81 : index
    %149 = vector.load %arg6[%c0_61, %c81_62] : memref<1x384xf32, #tpu.memory_space<vmem>>, vector<1x256xf32>
    %150 = vector.broadcast %148 : f32 to vector<1x256xf32>
    %151 = arith.mulf %150, %149 : vector<1x256xf32>
    %152 = arith.addf %147, %151 : vector<1x256xf32>
    %c92 = arith.constant 92 : index
    %153 = memref.load %arg1[%c92] : memref<98xf32, #tpu.memory_space<smem>>
    %c0_63 = arith.constant 0 : index
    %c97_64 = arith.constant 97 : index
    %154 = vector.load %arg6[%c0_63, %c97_64] : memref<1x384xf32, #tpu.memory_space<vmem>>, vector<1x256xf32>
    %155 = vector.broadcast %153 : f32 to vector<1x256xf32>
    %156 = arith.mulf %155, %154 : vector<1x256xf32>
    %157 = arith.addf %152, %156 : vector<1x256xf32>
    %c1_65 = arith.constant 1 : index
    %c0_66 = arith.constant 0 : index
    %158 = vector.load %arg3[%c1_65, %c0_66] : memref<8x256xf32, #tpu.memory_space<vmem>>, vector<1x256xf32>
    %159 = arith.mulf %157, %158 : vector<1x256xf32>
    %160 = arith.addf %88, %159 : vector<1x256xf32>
    %c2 = arith.constant 2 : index
    %161 = memref.load %arg1[%c2] : memref<98xf32, #tpu.memory_space<smem>>
    %c0_67 = arith.constant 0 : index
    %c2_68 = arith.constant 2 : index
    %162 = vector.load %arg5[%c0_67, %c2_68] : memref<1x384xf32, #tpu.memory_space<vmem>>, vector<1x256xf32>
    %163 = vector.broadcast %161 : f32 to vector<1x256xf32>
    %164 = arith.mulf %163, %162 : vector<1x256xf32>
    %c9 = arith.constant 9 : index
    %165 = memref.load %arg1[%c9] : memref<98xf32, #tpu.memory_space<smem>>
    %c0_69 = arith.constant 0 : index
    %c18 = arith.constant 18 : index
    %166 = vector.load %arg5[%c0_69, %c18] : memref<1x384xf32, #tpu.memory_space<vmem>>, vector<1x256xf32>
    %167 = vector.broadcast %165 : f32 to vector<1x256xf32>
    %168 = arith.mulf %167, %166 : vector<1x256xf32>
    %169 = arith.addf %164, %168 : vector<1x256xf32>
    %c16_70 = arith.constant 16 : index
    %170 = memref.load %arg1[%c16_70] : memref<98xf32, #tpu.memory_space<smem>>
    %c0_71 = arith.constant 0 : index
    %c34 = arith.constant 34 : index
    %171 = vector.load %arg5[%c0_71, %c34] : memref<1x384xf32, #tpu.memory_space<vmem>>, vector<1x256xf32>
    %172 = vector.broadcast %170 : f32 to vector<1x256xf32>
    %173 = arith.mulf %172, %171 : vector<1x256xf32>
    %174 = arith.addf %169, %173 : vector<1x256xf32>
    %c23 = arith.constant 23 : index
    %175 = memref.load %arg1[%c23] : memref<98xf32, #tpu.memory_space<smem>>
    %c0_72 = arith.constant 0 : index
    %c50_73 = arith.constant 50 : index
    %176 = vector.load %arg5[%c0_72, %c50_73] : memref<1x384xf32, #tpu.memory_space<vmem>>, vector<1x256xf32>
    %177 = vector.broadcast %175 : f32 to vector<1x256xf32>
    %178 = arith.mulf %177, %176 : vector<1x256xf32>
    %179 = arith.addf %174, %178 : vector<1x256xf32>
    %c30 = arith.constant 30 : index
    %180 = memref.load %arg1[%c30] : memref<98xf32, #tpu.memory_space<smem>>
    %c0_74 = arith.constant 0 : index
    %c66 = arith.constant 66 : index
    %181 = vector.load %arg5[%c0_74, %c66] : memref<1x384xf32, #tpu.memory_space<vmem>>, vector<1x256xf32>
    %182 = vector.broadcast %180 : f32 to vector<1x256xf32>
    %183 = arith.mulf %182, %181 : vector<1x256xf32>
    %184 = arith.addf %179, %183 : vector<1x256xf32>
    %c37 = arith.constant 37 : index
    %185 = memref.load %arg1[%c37] : memref<98xf32, #tpu.memory_space<smem>>
    %c0_75 = arith.constant 0 : index
    %c82 = arith.constant 82 : index
    %186 = vector.load %arg5[%c0_75, %c82] : memref<1x384xf32, #tpu.memory_space<vmem>>, vector<1x256xf32>
    %187 = vector.broadcast %185 : f32 to vector<1x256xf32>
    %188 = arith.mulf %187, %186 : vector<1x256xf32>
    %189 = arith.addf %184, %188 : vector<1x256xf32>
    %c44 = arith.constant 44 : index
    %190 = memref.load %arg1[%c44] : memref<98xf32, #tpu.memory_space<smem>>
    %c0_76 = arith.constant 0 : index
    %c98 = arith.constant 98 : index
    %191 = vector.load %arg5[%c0_76, %c98] : memref<1x384xf32, #tpu.memory_space<vmem>>, vector<1x256xf32>
    %192 = vector.broadcast %190 : f32 to vector<1x256xf32>
    %193 = arith.mulf %192, %191 : vector<1x256xf32>
    %194 = arith.addf %189, %193 : vector<1x256xf32>
    %c51_77 = arith.constant 51 : index
    %195 = memref.load %arg1[%c51_77] : memref<98xf32, #tpu.memory_space<smem>>
    %c0_78 = arith.constant 0 : index
    %c2_79 = arith.constant 2 : index
    %196 = vector.load %arg6[%c0_78, %c2_79] : memref<1x384xf32, #tpu.memory_space<vmem>>, vector<1x256xf32>
    %197 = vector.broadcast %195 : f32 to vector<1x256xf32>
    %198 = arith.mulf %197, %196 : vector<1x256xf32>
    %199 = arith.addf %194, %198 : vector<1x256xf32>
    %c58 = arith.constant 58 : index
    %200 = memref.load %arg1[%c58] : memref<98xf32, #tpu.memory_space<smem>>
    %c0_80 = arith.constant 0 : index
    %c18_81 = arith.constant 18 : index
    %201 = vector.load %arg6[%c0_80, %c18_81] : memref<1x384xf32, #tpu.memory_space<vmem>>, vector<1x256xf32>
    %202 = vector.broadcast %200 : f32 to vector<1x256xf32>
    %203 = arith.mulf %202, %201 : vector<1x256xf32>
    %204 = arith.addf %199, %203 : vector<1x256xf32>
    %c65_82 = arith.constant 65 : index
    %205 = memref.load %arg1[%c65_82] : memref<98xf32, #tpu.memory_space<smem>>
    %c0_83 = arith.constant 0 : index
    %c34_84 = arith.constant 34 : index
    %206 = vector.load %arg6[%c0_83, %c34_84] : memref<1x384xf32, #tpu.memory_space<vmem>>, vector<1x256xf32>
    %207 = vector.broadcast %205 : f32 to vector<1x256xf32>
    %208 = arith.mulf %207, %206 : vector<1x256xf32>
    %209 = arith.addf %204, %208 : vector<1x256xf32>
    %c72 = arith.constant 72 : index
    %210 = memref.load %arg1[%c72] : memref<98xf32, #tpu.memory_space<smem>>
    %c0_85 = arith.constant 0 : index
    %c50_86 = arith.constant 50 : index
    %211 = vector.load %arg6[%c0_85, %c50_86] : memref<1x384xf32, #tpu.memory_space<vmem>>, vector<1x256xf32>
    %212 = vector.broadcast %210 : f32 to vector<1x256xf32>
    %213 = arith.mulf %212, %211 : vector<1x256xf32>
    %214 = arith.addf %209, %213 : vector<1x256xf32>
    %c79 = arith.constant 79 : index
    %215 = memref.load %arg1[%c79] : memref<98xf32, #tpu.memory_space<smem>>
    %c0_87 = arith.constant 0 : index
    %c66_88 = arith.constant 66 : index
    %216 = vector.load %arg6[%c0_87, %c66_88] : memref<1x384xf32, #tpu.memory_space<vmem>>, vector<1x256xf32>
    %217 = vector.broadcast %215 : f32 to vector<1x256xf32>
    %218 = arith.mulf %217, %216 : vector<1x256xf32>
    %219 = arith.addf %214, %218 : vector<1x256xf32>
    %c86 = arith.constant 86 : index
    %220 = memref.load %arg1[%c86] : memref<98xf32, #tpu.memory_space<smem>>
    %c0_89 = arith.constant 0 : index
    %c82_90 = arith.constant 82 : index
    %221 = vector.load %arg6[%c0_89, %c82_90] : memref<1x384xf32, #tpu.memory_space<vmem>>, vector<1x256xf32>
    %222 = vector.broadcast %220 : f32 to vector<1x256xf32>
    %223 = arith.mulf %222, %221 : vector<1x256xf32>
    %224 = arith.addf %219, %223 : vector<1x256xf32>
    %c93 = arith.constant 93 : index
    %225 = memref.load %arg1[%c93] : memref<98xf32, #tpu.memory_space<smem>>
    %c0_91 = arith.constant 0 : index
    %c98_92 = arith.constant 98 : index
    %226 = vector.load %arg6[%c0_91, %c98_92] : memref<1x384xf32, #tpu.memory_space<vmem>>, vector<1x256xf32>
    %227 = vector.broadcast %225 : f32 to vector<1x256xf32>
    %228 = arith.mulf %227, %226 : vector<1x256xf32>
    %229 = arith.addf %224, %228 : vector<1x256xf32>
    %c2_93 = arith.constant 2 : index
    %c0_94 = arith.constant 0 : index
    %230 = vector.load %arg3[%c2_93, %c0_94] : memref<8x256xf32, #tpu.memory_space<vmem>>, vector<1x256xf32>
    %231 = arith.mulf %229, %230 : vector<1x256xf32>
    %232 = arith.addf %160, %231 : vector<1x256xf32>
    %c3 = arith.constant 3 : index
    %233 = memref.load %arg1[%c3] : memref<98xf32, #tpu.memory_space<smem>>
    %c0_95 = arith.constant 0 : index
    %c3_96 = arith.constant 3 : index
    %234 = vector.load %arg5[%c0_95, %c3_96] : memref<1x384xf32, #tpu.memory_space<vmem>>, vector<1x256xf32>
    %235 = vector.broadcast %233 : f32 to vector<1x256xf32>
    %236 = arith.mulf %235, %234 : vector<1x256xf32>
    %c10 = arith.constant 10 : index
    %237 = memref.load %arg1[%c10] : memref<98xf32, #tpu.memory_space<smem>>
    %c0_97 = arith.constant 0 : index
    %c19 = arith.constant 19 : index
    %238 = vector.load %arg5[%c0_97, %c19] : memref<1x384xf32, #tpu.memory_space<vmem>>, vector<1x256xf32>
    %239 = vector.broadcast %237 : f32 to vector<1x256xf32>
    %240 = arith.mulf %239, %238 : vector<1x256xf32>
    %241 = arith.addf %236, %240 : vector<1x256xf32>
    %c17_98 = arith.constant 17 : index
    %242 = memref.load %arg1[%c17_98] : memref<98xf32, #tpu.memory_space<smem>>
    %c0_99 = arith.constant 0 : index
    %c35_100 = arith.constant 35 : index
    %243 = vector.load %arg5[%c0_99, %c35_100] : memref<1x384xf32, #tpu.memory_space<vmem>>, vector<1x256xf32>
    %244 = vector.broadcast %242 : f32 to vector<1x256xf32>
    %245 = arith.mulf %244, %243 : vector<1x256xf32>
    %246 = arith.addf %241, %245 : vector<1x256xf32>
    %c24 = arith.constant 24 : index
    %247 = memref.load %arg1[%c24] : memref<98xf32, #tpu.memory_space<smem>>
    %c0_101 = arith.constant 0 : index
    %c51_102 = arith.constant 51 : index
    %248 = vector.load %arg5[%c0_101, %c51_102] : memref<1x384xf32, #tpu.memory_space<vmem>>, vector<1x256xf32>
    %249 = vector.broadcast %247 : f32 to vector<1x256xf32>
    %250 = arith.mulf %249, %248 : vector<1x256xf32>
    %251 = arith.addf %246, %250 : vector<1x256xf32>
    %c31 = arith.constant 31 : index
    %252 = memref.load %arg1[%c31] : memref<98xf32, #tpu.memory_space<smem>>
    %c0_103 = arith.constant 0 : index
    %c67 = arith.constant 67 : index
    %253 = vector.load %arg5[%c0_103, %c67] : memref<1x384xf32, #tpu.memory_space<vmem>>, vector<1x256xf32>
    %254 = vector.broadcast %252 : f32 to vector<1x256xf32>
    %255 = arith.mulf %254, %253 : vector<1x256xf32>
    %256 = arith.addf %251, %255 : vector<1x256xf32>
    %c38 = arith.constant 38 : index
    %257 = memref.load %arg1[%c38] : memref<98xf32, #tpu.memory_space<smem>>
    %c0_104 = arith.constant 0 : index
    %c83 = arith.constant 83 : index
    %258 = vector.load %arg5[%c0_104, %c83] : memref<1x384xf32, #tpu.memory_space<vmem>>, vector<1x256xf32>
    %259 = vector.broadcast %257 : f32 to vector<1x256xf32>
    %260 = arith.mulf %259, %258 : vector<1x256xf32>
    %261 = arith.addf %256, %260 : vector<1x256xf32>
    %c45 = arith.constant 45 : index
    %262 = memref.load %arg1[%c45] : memref<98xf32, #tpu.memory_space<smem>>
    %c0_105 = arith.constant 0 : index
    %c99 = arith.constant 99 : index
    %263 = vector.load %arg5[%c0_105, %c99] : memref<1x384xf32, #tpu.memory_space<vmem>>, vector<1x256xf32>
    %264 = vector.broadcast %262 : f32 to vector<1x256xf32>
    %265 = arith.mulf %264, %263 : vector<1x256xf32>
    %266 = arith.addf %261, %265 : vector<1x256xf32>
    %c52 = arith.constant 52 : index
    %267 = memref.load %arg1[%c52] : memref<98xf32, #tpu.memory_space<smem>>
    %c0_106 = arith.constant 0 : index
    %c3_107 = arith.constant 3 : index
    %268 = vector.load %arg6[%c0_106, %c3_107] : memref<1x384xf32, #tpu.memory_space<vmem>>, vector<1x256xf32>
    %269 = vector.broadcast %267 : f32 to vector<1x256xf32>
    %270 = arith.mulf %269, %268 : vector<1x256xf32>
    %271 = arith.addf %266, %270 : vector<1x256xf32>
    %c59 = arith.constant 59 : index
    %272 = memref.load %arg1[%c59] : memref<98xf32, #tpu.memory_space<smem>>
    %c0_108 = arith.constant 0 : index
    %c19_109 = arith.constant 19 : index
    %273 = vector.load %arg6[%c0_108, %c19_109] : memref<1x384xf32, #tpu.memory_space<vmem>>, vector<1x256xf32>
    %274 = vector.broadcast %272 : f32 to vector<1x256xf32>
    %275 = arith.mulf %274, %273 : vector<1x256xf32>
    %276 = arith.addf %271, %275 : vector<1x256xf32>
    %c66_110 = arith.constant 66 : index
    %277 = memref.load %arg1[%c66_110] : memref<98xf32, #tpu.memory_space<smem>>
    %c0_111 = arith.constant 0 : index
    %c35_112 = arith.constant 35 : index
    %278 = vector.load %arg6[%c0_111, %c35_112] : memref<1x384xf32, #tpu.memory_space<vmem>>, vector<1x256xf32>
    %279 = vector.broadcast %277 : f32 to vector<1x256xf32>
    %280 = arith.mulf %279, %278 : vector<1x256xf32>
    %281 = arith.addf %276, %280 : vector<1x256xf32>
    %c73 = arith.constant 73 : index
    %282 = memref.load %arg1[%c73] : memref<98xf32, #tpu.memory_space<smem>>
    %c0_113 = arith.constant 0 : index
    %c51_114 = arith.constant 51 : index
    %283 = vector.load %arg6[%c0_113, %c51_114] : memref<1x384xf32, #tpu.memory_space<vmem>>, vector<1x256xf32>
    %284 = vector.broadcast %282 : f32 to vector<1x256xf32>
    %285 = arith.mulf %284, %283 : vector<1x256xf32>
    %286 = arith.addf %281, %285 : vector<1x256xf32>
    %c80_115 = arith.constant 80 : index
    %287 = memref.load %arg1[%c80_115] : memref<98xf32, #tpu.memory_space<smem>>
    %c0_116 = arith.constant 0 : index
    %c67_117 = arith.constant 67 : index
    %288 = vector.load %arg6[%c0_116, %c67_117] : memref<1x384xf32, #tpu.memory_space<vmem>>, vector<1x256xf32>
    %289 = vector.broadcast %287 : f32 to vector<1x256xf32>
    %290 = arith.mulf %289, %288 : vector<1x256xf32>
    %291 = arith.addf %286, %290 : vector<1x256xf32>
    %c87 = arith.constant 87 : index
    %292 = memref.load %arg1[%c87] : memref<98xf32, #tpu.memory_space<smem>>
    %c0_118 = arith.constant 0 : index
    %c83_119 = arith.constant 83 : index
    %293 = vector.load %arg6[%c0_118, %c83_119] : memref<1x384xf32, #tpu.memory_space<vmem>>, vector<1x256xf32>
    %294 = vector.broadcast %292 : f32 to vector<1x256xf32>
    %295 = arith.mulf %294, %293 : vector<1x256xf32>
    %296 = arith.addf %291, %295 : vector<1x256xf32>
    %c94 = arith.constant 94 : index
    %297 = memref.load %arg1[%c94] : memref<98xf32, #tpu.memory_space<smem>>
    %c0_120 = arith.constant 0 : index
    %c99_121 = arith.constant 99 : index
    %298 = vector.load %arg6[%c0_120, %c99_121] : memref<1x384xf32, #tpu.memory_space<vmem>>, vector<1x256xf32>
    %299 = vector.broadcast %297 : f32 to vector<1x256xf32>
    %300 = arith.mulf %299, %298 : vector<1x256xf32>
    %301 = arith.addf %296, %300 : vector<1x256xf32>
    %c3_122 = arith.constant 3 : index
    %c0_123 = arith.constant 0 : index
    %302 = vector.load %arg3[%c3_122, %c0_123] : memref<8x256xf32, #tpu.memory_space<vmem>>, vector<1x256xf32>
    %303 = arith.mulf %301, %302 : vector<1x256xf32>
    %304 = arith.addf %232, %303 : vector<1x256xf32>
    %c4 = arith.constant 4 : index
    %305 = memref.load %arg1[%c4] : memref<98xf32, #tpu.memory_space<smem>>
    %c0_124 = arith.constant 0 : index
    %c4_125 = arith.constant 4 : index
    %306 = vector.load %arg5[%c0_124, %c4_125] : memref<1x384xf32, #tpu.memory_space<vmem>>, vector<1x256xf32>
    %307 = vector.broadcast %305 : f32 to vector<1x256xf32>
    %308 = arith.mulf %307, %306 : vector<1x256xf32>
    %c11 = arith.constant 11 : index
    %309 = memref.load %arg1[%c11] : memref<98xf32, #tpu.memory_space<smem>>
    %c0_126 = arith.constant 0 : index
    %c20 = arith.constant 20 : index
    %310 = vector.load %arg5[%c0_126, %c20] : memref<1x384xf32, #tpu.memory_space<vmem>>, vector<1x256xf32>
    %311 = vector.broadcast %309 : f32 to vector<1x256xf32>
    %312 = arith.mulf %311, %310 : vector<1x256xf32>
    %313 = arith.addf %308, %312 : vector<1x256xf32>
    %c18_127 = arith.constant 18 : index
    %314 = memref.load %arg1[%c18_127] : memref<98xf32, #tpu.memory_space<smem>>
    %c0_128 = arith.constant 0 : index
    %c36_129 = arith.constant 36 : index
    %315 = vector.load %arg5[%c0_128, %c36_129] : memref<1x384xf32, #tpu.memory_space<vmem>>, vector<1x256xf32>
    %316 = vector.broadcast %314 : f32 to vector<1x256xf32>
    %317 = arith.mulf %316, %315 : vector<1x256xf32>
    %318 = arith.addf %313, %317 : vector<1x256xf32>
    %c25 = arith.constant 25 : index
    %319 = memref.load %arg1[%c25] : memref<98xf32, #tpu.memory_space<smem>>
    %c0_130 = arith.constant 0 : index
    %c52_131 = arith.constant 52 : index
    %320 = vector.load %arg5[%c0_130, %c52_131] : memref<1x384xf32, #tpu.memory_space<vmem>>, vector<1x256xf32>
    %321 = vector.broadcast %319 : f32 to vector<1x256xf32>
    %322 = arith.mulf %321, %320 : vector<1x256xf32>
    %323 = arith.addf %318, %322 : vector<1x256xf32>
    %c32_132 = arith.constant 32 : index
    %324 = memref.load %arg1[%c32_132] : memref<98xf32, #tpu.memory_space<smem>>
    %c0_133 = arith.constant 0 : index
    %c68 = arith.constant 68 : index
    %325 = vector.load %arg5[%c0_133, %c68] : memref<1x384xf32, #tpu.memory_space<vmem>>, vector<1x256xf32>
    %326 = vector.broadcast %324 : f32 to vector<1x256xf32>
    %327 = arith.mulf %326, %325 : vector<1x256xf32>
    %328 = arith.addf %323, %327 : vector<1x256xf32>
    %c39 = arith.constant 39 : index
    %329 = memref.load %arg1[%c39] : memref<98xf32, #tpu.memory_space<smem>>
    %c0_134 = arith.constant 0 : index
    %c84_135 = arith.constant 84 : index
    %330 = vector.load %arg5[%c0_134, %c84_135] : memref<1x384xf32, #tpu.memory_space<vmem>>, vector<1x256xf32>
    %331 = vector.broadcast %329 : f32 to vector<1x256xf32>
    %332 = arith.mulf %331, %330 : vector<1x256xf32>
    %333 = arith.addf %328, %332 : vector<1x256xf32>
    %c46 = arith.constant 46 : index
    %334 = memref.load %arg1[%c46] : memref<98xf32, #tpu.memory_space<smem>>
    %c0_136 = arith.constant 0 : index
    %c100 = arith.constant 100 : index
    %335 = vector.load %arg5[%c0_136, %c100] : memref<1x384xf32, #tpu.memory_space<vmem>>, vector<1x256xf32>
    %336 = vector.broadcast %334 : f32 to vector<1x256xf32>
    %337 = arith.mulf %336, %335 : vector<1x256xf32>
    %338 = arith.addf %333, %337 : vector<1x256xf32>
    %c53 = arith.constant 53 : index
    %339 = memref.load %arg1[%c53] : memref<98xf32, #tpu.memory_space<smem>>
    %c0_137 = arith.constant 0 : index
    %c4_138 = arith.constant 4 : index
    %340 = vector.load %arg6[%c0_137, %c4_138] : memref<1x384xf32, #tpu.memory_space<vmem>>, vector<1x256xf32>
    %341 = vector.broadcast %339 : f32 to vector<1x256xf32>
    %342 = arith.mulf %341, %340 : vector<1x256xf32>
    %343 = arith.addf %338, %342 : vector<1x256xf32>
    %c60 = arith.constant 60 : index
    %344 = memref.load %arg1[%c60] : memref<98xf32, #tpu.memory_space<smem>>
    %c0_139 = arith.constant 0 : index
    %c20_140 = arith.constant 20 : index
    %345 = vector.load %arg6[%c0_139, %c20_140] : memref<1x384xf32, #tpu.memory_space<vmem>>, vector<1x256xf32>
    %346 = vector.broadcast %344 : f32 to vector<1x256xf32>
    %347 = arith.mulf %346, %345 : vector<1x256xf32>
    %348 = arith.addf %343, %347 : vector<1x256xf32>
    %c67_141 = arith.constant 67 : index
    %349 = memref.load %arg1[%c67_141] : memref<98xf32, #tpu.memory_space<smem>>
    %c0_142 = arith.constant 0 : index
    %c36_143 = arith.constant 36 : index
    %350 = vector.load %arg6[%c0_142, %c36_143] : memref<1x384xf32, #tpu.memory_space<vmem>>, vector<1x256xf32>
    %351 = vector.broadcast %349 : f32 to vector<1x256xf32>
    %352 = arith.mulf %351, %350 : vector<1x256xf32>
    %353 = arith.addf %348, %352 : vector<1x256xf32>
    %c74 = arith.constant 74 : index
    %354 = memref.load %arg1[%c74] : memref<98xf32, #tpu.memory_space<smem>>
    %c0_144 = arith.constant 0 : index
    %c52_145 = arith.constant 52 : index
    %355 = vector.load %arg6[%c0_144, %c52_145] : memref<1x384xf32, #tpu.memory_space<vmem>>, vector<1x256xf32>
    %356 = vector.broadcast %354 : f32 to vector<1x256xf32>
    %357 = arith.mulf %356, %355 : vector<1x256xf32>
    %358 = arith.addf %353, %357 : vector<1x256xf32>
    %c81_146 = arith.constant 81 : index
    %359 = memref.load %arg1[%c81_146] : memref<98xf32, #tpu.memory_space<smem>>
    %c0_147 = arith.constant 0 : index
    %c68_148 = arith.constant 68 : index
    %360 = vector.load %arg6[%c0_147, %c68_148] : memref<1x384xf32, #tpu.memory_space<vmem>>, vector<1x256xf32>
    %361 = vector.broadcast %359 : f32 to vector<1x256xf32>
    %362 = arith.mulf %361, %360 : vector<1x256xf32>
    %363 = arith.addf %358, %362 : vector<1x256xf32>
    %c88 = arith.constant 88 : index
    %364 = memref.load %arg1[%c88] : memref<98xf32, #tpu.memory_space<smem>>
    %c0_149 = arith.constant 0 : index
    %c84_150 = arith.constant 84 : index
    %365 = vector.load %arg6[%c0_149, %c84_150] : memref<1x384xf32, #tpu.memory_space<vmem>>, vector<1x256xf32>
    %366 = vector.broadcast %364 : f32 to vector<1x256xf32>
    %367 = arith.mulf %366, %365 : vector<1x256xf32>
    %368 = arith.addf %363, %367 : vector<1x256xf32>
    %c95 = arith.constant 95 : index
    %369 = memref.load %arg1[%c95] : memref<98xf32, #tpu.memory_space<smem>>
    %c0_151 = arith.constant 0 : index
    %c100_152 = arith.constant 100 : index
    %370 = vector.load %arg6[%c0_151, %c100_152] : memref<1x384xf32, #tpu.memory_space<vmem>>, vector<1x256xf32>
    %371 = vector.broadcast %369 : f32 to vector<1x256xf32>
    %372 = arith.mulf %371, %370 : vector<1x256xf32>
    %373 = arith.addf %368, %372 : vector<1x256xf32>
    %c4_153 = arith.constant 4 : index
    %c0_154 = arith.constant 0 : index
    %374 = vector.load %arg3[%c4_153, %c0_154] : memref<8x256xf32, #tpu.memory_space<vmem>>, vector<1x256xf32>
    %375 = arith.mulf %373, %374 : vector<1x256xf32>
    %376 = arith.addf %304, %375 : vector<1x256xf32>
    %c5 = arith.constant 5 : index
    %377 = memref.load %arg1[%c5] : memref<98xf32, #tpu.memory_space<smem>>
    %c0_155 = arith.constant 0 : index
    %c5_156 = arith.constant 5 : index
    %378 = vector.load %arg5[%c0_155, %c5_156] : memref<1x384xf32, #tpu.memory_space<vmem>>, vector<1x256xf32>
    %379 = vector.broadcast %377 : f32 to vector<1x256xf32>
    %380 = arith.mulf %379, %378 : vector<1x256xf32>
    %c12 = arith.constant 12 : index
    %381 = memref.load %arg1[%c12] : memref<98xf32, #tpu.memory_space<smem>>
    %c0_157 = arith.constant 0 : index
    %c21_158 = arith.constant 21 : index
    %382 = vector.load %arg5[%c0_157, %c21_158] : memref<1x384xf32, #tpu.memory_space<vmem>>, vector<1x256xf32>
    %383 = vector.broadcast %381 : f32 to vector<1x256xf32>
    %384 = arith.mulf %383, %382 : vector<1x256xf32>
    %385 = arith.addf %380, %384 : vector<1x256xf32>
    %c19_159 = arith.constant 19 : index
    %386 = memref.load %arg1[%c19_159] : memref<98xf32, #tpu.memory_space<smem>>
    %c0_160 = arith.constant 0 : index
    %c37_161 = arith.constant 37 : index
    %387 = vector.load %arg5[%c0_160, %c37_161] : memref<1x384xf32, #tpu.memory_space<vmem>>, vector<1x256xf32>
    %388 = vector.broadcast %386 : f32 to vector<1x256xf32>
    %389 = arith.mulf %388, %387 : vector<1x256xf32>
    %390 = arith.addf %385, %389 : vector<1x256xf32>
    %c26 = arith.constant 26 : index
    %391 = memref.load %arg1[%c26] : memref<98xf32, #tpu.memory_space<smem>>
    %c0_162 = arith.constant 0 : index
    %c53_163 = arith.constant 53 : index
    %392 = vector.load %arg5[%c0_162, %c53_163] : memref<1x384xf32, #tpu.memory_space<vmem>>, vector<1x256xf32>
    %393 = vector.broadcast %391 : f32 to vector<1x256xf32>
    %394 = arith.mulf %393, %392 : vector<1x256xf32>
    %395 = arith.addf %390, %394 : vector<1x256xf32>
    %c33_164 = arith.constant 33 : index
    %396 = memref.load %arg1[%c33_164] : memref<98xf32, #tpu.memory_space<smem>>
    %c0_165 = arith.constant 0 : index
    %c69 = arith.constant 69 : index
    %397 = vector.load %arg5[%c0_165, %c69] : memref<1x384xf32, #tpu.memory_space<vmem>>, vector<1x256xf32>
    %398 = vector.broadcast %396 : f32 to vector<1x256xf32>
    %399 = arith.mulf %398, %397 : vector<1x256xf32>
    %400 = arith.addf %395, %399 : vector<1x256xf32>
    %c40 = arith.constant 40 : index
    %401 = memref.load %arg1[%c40] : memref<98xf32, #tpu.memory_space<smem>>
    %c0_166 = arith.constant 0 : index
    %c85_167 = arith.constant 85 : index
    %402 = vector.load %arg5[%c0_166, %c85_167] : memref<1x384xf32, #tpu.memory_space<vmem>>, vector<1x256xf32>
    %403 = vector.broadcast %401 : f32 to vector<1x256xf32>
    %404 = arith.mulf %403, %402 : vector<1x256xf32>
    %405 = arith.addf %400, %404 : vector<1x256xf32>
    %c47 = arith.constant 47 : index
    %406 = memref.load %arg1[%c47] : memref<98xf32, #tpu.memory_space<smem>>
    %c0_168 = arith.constant 0 : index
    %c101 = arith.constant 101 : index
    %407 = vector.load %arg5[%c0_168, %c101] : memref<1x384xf32, #tpu.memory_space<vmem>>, vector<1x256xf32>
    %408 = vector.broadcast %406 : f32 to vector<1x256xf32>
    %409 = arith.mulf %408, %407 : vector<1x256xf32>
    %410 = arith.addf %405, %409 : vector<1x256xf32>
    %c54 = arith.constant 54 : index
    %411 = memref.load %arg1[%c54] : memref<98xf32, #tpu.memory_space<smem>>
    %c0_169 = arith.constant 0 : index
    %c5_170 = arith.constant 5 : index
    %412 = vector.load %arg6[%c0_169, %c5_170] : memref<1x384xf32, #tpu.memory_space<vmem>>, vector<1x256xf32>
    %413 = vector.broadcast %411 : f32 to vector<1x256xf32>
    %414 = arith.mulf %413, %412 : vector<1x256xf32>
    %415 = arith.addf %410, %414 : vector<1x256xf32>
    %c61 = arith.constant 61 : index
    %416 = memref.load %arg1[%c61] : memref<98xf32, #tpu.memory_space<smem>>
    %c0_171 = arith.constant 0 : index
    %c21_172 = arith.constant 21 : index
    %417 = vector.load %arg6[%c0_171, %c21_172] : memref<1x384xf32, #tpu.memory_space<vmem>>, vector<1x256xf32>
    %418 = vector.broadcast %416 : f32 to vector<1x256xf32>
    %419 = arith.mulf %418, %417 : vector<1x256xf32>
    %420 = arith.addf %415, %419 : vector<1x256xf32>
    %c68_173 = arith.constant 68 : index
    %421 = memref.load %arg1[%c68_173] : memref<98xf32, #tpu.memory_space<smem>>
    %c0_174 = arith.constant 0 : index
    %c37_175 = arith.constant 37 : index
    %422 = vector.load %arg6[%c0_174, %c37_175] : memref<1x384xf32, #tpu.memory_space<vmem>>, vector<1x256xf32>
    %423 = vector.broadcast %421 : f32 to vector<1x256xf32>
    %424 = arith.mulf %423, %422 : vector<1x256xf32>
    %425 = arith.addf %420, %424 : vector<1x256xf32>
    %c75 = arith.constant 75 : index
    %426 = memref.load %arg1[%c75] : memref<98xf32, #tpu.memory_space<smem>>
    %c0_176 = arith.constant 0 : index
    %c53_177 = arith.constant 53 : index
    %427 = vector.load %arg6[%c0_176, %c53_177] : memref<1x384xf32, #tpu.memory_space<vmem>>, vector<1x256xf32>
    %428 = vector.broadcast %426 : f32 to vector<1x256xf32>
    %429 = arith.mulf %428, %427 : vector<1x256xf32>
    %430 = arith.addf %425, %429 : vector<1x256xf32>
    %c82_178 = arith.constant 82 : index
    %431 = memref.load %arg1[%c82_178] : memref<98xf32, #tpu.memory_space<smem>>
    %c0_179 = arith.constant 0 : index
    %c69_180 = arith.constant 69 : index
    %432 = vector.load %arg6[%c0_179, %c69_180] : memref<1x384xf32, #tpu.memory_space<vmem>>, vector<1x256xf32>
    %433 = vector.broadcast %431 : f32 to vector<1x256xf32>
    %434 = arith.mulf %433, %432 : vector<1x256xf32>
    %435 = arith.addf %430, %434 : vector<1x256xf32>
    %c89 = arith.constant 89 : index
    %436 = memref.load %arg1[%c89] : memref<98xf32, #tpu.memory_space<smem>>
    %c0_181 = arith.constant 0 : index
    %c85_182 = arith.constant 85 : index
    %437 = vector.load %arg6[%c0_181, %c85_182] : memref<1x384xf32, #tpu.memory_space<vmem>>, vector<1x256xf32>
    %438 = vector.broadcast %436 : f32 to vector<1x256xf32>
    %439 = arith.mulf %438, %437 : vector<1x256xf32>
    %440 = arith.addf %435, %439 : vector<1x256xf32>
    %c96_183 = arith.constant 96 : index
    %441 = memref.load %arg1[%c96_183] : memref<98xf32, #tpu.memory_space<smem>>
    %c0_184 = arith.constant 0 : index
    %c101_185 = arith.constant 101 : index
    %442 = vector.load %arg6[%c0_184, %c101_185] : memref<1x384xf32, #tpu.memory_space<vmem>>, vector<1x256xf32>
    %443 = vector.broadcast %441 : f32 to vector<1x256xf32>
    %444 = arith.mulf %443, %442 : vector<1x256xf32>
    %445 = arith.addf %440, %444 : vector<1x256xf32>
    %c5_186 = arith.constant 5 : index
    %c0_187 = arith.constant 0 : index
    %446 = vector.load %arg3[%c5_186, %c0_187] : memref<8x256xf32, #tpu.memory_space<vmem>>, vector<1x256xf32>
    %447 = arith.mulf %445, %446 : vector<1x256xf32>
    %448 = arith.addf %376, %447 : vector<1x256xf32>
    %c6 = arith.constant 6 : index
    %449 = memref.load %arg1[%c6] : memref<98xf32, #tpu.memory_space<smem>>
    %c0_188 = arith.constant 0 : index
    %c6_189 = arith.constant 6 : index
    %450 = vector.load %arg5[%c0_188, %c6_189] : memref<1x384xf32, #tpu.memory_space<vmem>>, vector<1x256xf32>
    %451 = vector.broadcast %449 : f32 to vector<1x256xf32>
    %452 = arith.mulf %451, %450 : vector<1x256xf32>
    %c13 = arith.constant 13 : index
    %453 = memref.load %arg1[%c13] : memref<98xf32, #tpu.memory_space<smem>>
    %c0_190 = arith.constant 0 : index
    %c22_191 = arith.constant 22 : index
    %454 = vector.load %arg5[%c0_190, %c22_191] : memref<1x384xf32, #tpu.memory_space<vmem>>, vector<1x256xf32>
    %455 = vector.broadcast %453 : f32 to vector<1x256xf32>
    %456 = arith.mulf %455, %454 : vector<1x256xf32>
    %457 = arith.addf %452, %456 : vector<1x256xf32>
    %c20_192 = arith.constant 20 : index
    %458 = memref.load %arg1[%c20_192] : memref<98xf32, #tpu.memory_space<smem>>
    %c0_193 = arith.constant 0 : index
    %c38_194 = arith.constant 38 : index
    %459 = vector.load %arg5[%c0_193, %c38_194] : memref<1x384xf32, #tpu.memory_space<vmem>>, vector<1x256xf32>
    %460 = vector.broadcast %458 : f32 to vector<1x256xf32>
    %461 = arith.mulf %460, %459 : vector<1x256xf32>
    %462 = arith.addf %457, %461 : vector<1x256xf32>
    %c27 = arith.constant 27 : index
    %463 = memref.load %arg1[%c27] : memref<98xf32, #tpu.memory_space<smem>>
    %c0_195 = arith.constant 0 : index
    %c54_196 = arith.constant 54 : index
    %464 = vector.load %arg5[%c0_195, %c54_196] : memref<1x384xf32, #tpu.memory_space<vmem>>, vector<1x256xf32>
    %465 = vector.broadcast %463 : f32 to vector<1x256xf32>
    %466 = arith.mulf %465, %464 : vector<1x256xf32>
    %467 = arith.addf %462, %466 : vector<1x256xf32>
    %c34_197 = arith.constant 34 : index
    %468 = memref.load %arg1[%c34_197] : memref<98xf32, #tpu.memory_space<smem>>
    %c0_198 = arith.constant 0 : index
    %c70_199 = arith.constant 70 : index
    %469 = vector.load %arg5[%c0_198, %c70_199] : memref<1x384xf32, #tpu.memory_space<vmem>>, vector<1x256xf32>
    %470 = vector.broadcast %468 : f32 to vector<1x256xf32>
    %471 = arith.mulf %470, %469 : vector<1x256xf32>
    %472 = arith.addf %467, %471 : vector<1x256xf32>
    %c41 = arith.constant 41 : index
    %473 = memref.load %arg1[%c41] : memref<98xf32, #tpu.memory_space<smem>>
    %c0_200 = arith.constant 0 : index
    %c86_201 = arith.constant 86 : index
    %474 = vector.load %arg5[%c0_200, %c86_201] : memref<1x384xf32, #tpu.memory_space<vmem>>, vector<1x256xf32>
    %475 = vector.broadcast %473 : f32 to vector<1x256xf32>
    %476 = arith.mulf %475, %474 : vector<1x256xf32>
    %477 = arith.addf %472, %476 : vector<1x256xf32>
    %c48_202 = arith.constant 48 : index
    %478 = memref.load %arg1[%c48_202] : memref<98xf32, #tpu.memory_space<smem>>
    %c0_203 = arith.constant 0 : index
    %c102 = arith.constant 102 : index
    %479 = vector.load %arg5[%c0_203, %c102] : memref<1x384xf32, #tpu.memory_space<vmem>>, vector<1x256xf32>
    %480 = vector.broadcast %478 : f32 to vector<1x256xf32>
    %481 = arith.mulf %480, %479 : vector<1x256xf32>
    %482 = arith.addf %477, %481 : vector<1x256xf32>
    %c55 = arith.constant 55 : index
    %483 = memref.load %arg1[%c55] : memref<98xf32, #tpu.memory_space<smem>>
    %c0_204 = arith.constant 0 : index
    %c6_205 = arith.constant 6 : index
    %484 = vector.load %arg6[%c0_204, %c6_205] : memref<1x384xf32, #tpu.memory_space<vmem>>, vector<1x256xf32>
    %485 = vector.broadcast %483 : f32 to vector<1x256xf32>
    %486 = arith.mulf %485, %484 : vector<1x256xf32>
    %487 = arith.addf %482, %486 : vector<1x256xf32>
    %c62 = arith.constant 62 : index
    %488 = memref.load %arg1[%c62] : memref<98xf32, #tpu.memory_space<smem>>
    %c0_206 = arith.constant 0 : index
    %c22_207 = arith.constant 22 : index
    %489 = vector.load %arg6[%c0_206, %c22_207] : memref<1x384xf32, #tpu.memory_space<vmem>>, vector<1x256xf32>
    %490 = vector.broadcast %488 : f32 to vector<1x256xf32>
    %491 = arith.mulf %490, %489 : vector<1x256xf32>
    %492 = arith.addf %487, %491 : vector<1x256xf32>
    %c69_208 = arith.constant 69 : index
    %493 = memref.load %arg1[%c69_208] : memref<98xf32, #tpu.memory_space<smem>>
    %c0_209 = arith.constant 0 : index
    %c38_210 = arith.constant 38 : index
    %494 = vector.load %arg6[%c0_209, %c38_210] : memref<1x384xf32, #tpu.memory_space<vmem>>, vector<1x256xf32>
    %495 = vector.broadcast %493 : f32 to vector<1x256xf32>
    %496 = arith.mulf %495, %494 : vector<1x256xf32>
    %497 = arith.addf %492, %496 : vector<1x256xf32>
    %c76 = arith.constant 76 : index
    %498 = memref.load %arg1[%c76] : memref<98xf32, #tpu.memory_space<smem>>
    %c0_211 = arith.constant 0 : index
    %c54_212 = arith.constant 54 : index
    %499 = vector.load %arg6[%c0_211, %c54_212] : memref<1x384xf32, #tpu.memory_space<vmem>>, vector<1x256xf32>
    %500 = vector.broadcast %498 : f32 to vector<1x256xf32>
    %501 = arith.mulf %500, %499 : vector<1x256xf32>
    %502 = arith.addf %497, %501 : vector<1x256xf32>
    %c83_213 = arith.constant 83 : index
    %503 = memref.load %arg1[%c83_213] : memref<98xf32, #tpu.memory_space<smem>>
    %c0_214 = arith.constant 0 : index
    %c70_215 = arith.constant 70 : index
    %504 = vector.load %arg6[%c0_214, %c70_215] : memref<1x384xf32, #tpu.memory_space<vmem>>, vector<1x256xf32>
    %505 = vector.broadcast %503 : f32 to vector<1x256xf32>
    %506 = arith.mulf %505, %504 : vector<1x256xf32>
    %507 = arith.addf %502, %506 : vector<1x256xf32>
    %c90 = arith.constant 90 : index
    %508 = memref.load %arg1[%c90] : memref<98xf32, #tpu.memory_space<smem>>
    %c0_216 = arith.constant 0 : index
    %c86_217 = arith.constant 86 : index
    %509 = vector.load %arg6[%c0_216, %c86_217] : memref<1x384xf32, #tpu.memory_space<vmem>>, vector<1x256xf32>
    %510 = vector.broadcast %508 : f32 to vector<1x256xf32>
    %511 = arith.mulf %510, %509 : vector<1x256xf32>
    %512 = arith.addf %507, %511 : vector<1x256xf32>
    %c97_218 = arith.constant 97 : index
    %513 = memref.load %arg1[%c97_218] : memref<98xf32, #tpu.memory_space<smem>>
    %c0_219 = arith.constant 0 : index
    %c102_220 = arith.constant 102 : index
    %514 = vector.load %arg6[%c0_219, %c102_220] : memref<1x384xf32, #tpu.memory_space<vmem>>, vector<1x256xf32>
    %515 = vector.broadcast %513 : f32 to vector<1x256xf32>
    %516 = arith.mulf %515, %514 : vector<1x256xf32>
    %517 = arith.addf %512, %516 : vector<1x256xf32>
    %c6_221 = arith.constant 6 : index
    %c0_222 = arith.constant 0 : index
    %518 = vector.load %arg3[%c6_221, %c0_222] : memref<8x256xf32, #tpu.memory_space<vmem>>, vector<1x256xf32>
    %519 = arith.mulf %517, %518 : vector<1x256xf32>
    %520 = arith.addf %448, %519 : vector<1x256xf32>
    %521 = arith.negf %520 : vector<1x256xf32>
    %522 = math.exp %521 : vector<1x256xf32>
    %cst_223 = arith.constant 1.000000e+00 : f32
    %523 = vector.broadcast %cst_223 : f32 to vector<1x256xf32>
    %524 = arith.addf %523, %522 : vector<1x256xf32>
    %525 = arith.divf %523, %524 : vector<1x256xf32>
    %c0_224 = arith.constant 0 : index
    %c0_225 = arith.constant 0 : index
    %c0_226 = arith.constant 0 : index
    %526 = vector.load %arg2[%c0_224, %c0_225, %c0_226] : memref<1x16x256xf32, #tpu.memory_space<vmem>>, vector<1x8x256xf32>
    %527 = vector.shape_cast %526 : vector<1x8x256xf32> to vector<8x256xf32>
    %528 = vector.broadcast %525 : vector<1x256xf32> to vector<8x256xf32>
    %529 = arith.mulf %527, %528 : vector<8x256xf32>
    %c0_227 = arith.constant 0 : index
    %c0_228 = arith.constant 0 : index
    %c0_229 = arith.constant 0 : index
    %530 = vector.load %arg4[%c0_227, %c0_228, %c0_229] : memref<1x16x256xf32, #tpu.memory_space<vmem>>, vector<1x8x256xf32>
    %531 = vector.shape_cast %530 : vector<1x8x256xf32> to vector<8x256xf32>
    %532 = vector.shape_cast %529 : vector<8x256xf32> to vector<1x8x256xf32>
    tpu.vector_store %arg4[%c0_227, %c0_228, %c0_229], %532 {strides = array<i32>} : memref<1x16x256xf32, #tpu.memory_space<vmem>>, vector<1x8x256xf32>,
    %c0_230 = arith.constant 0 : index
    %c8_231 = arith.constant 8 : index
    %c0_232 = arith.constant 0 : index
    %533 = vector.load %arg2[%c0_230, %c8_231, %c0_232] : memref<1x16x256xf32, #tpu.memory_space<vmem>>, vector<1x8x256xf32>
    %534 = vector.shape_cast %533 : vector<1x8x256xf32> to vector<8x256xf32>
    %535 = vector.broadcast %525 : vector<1x256xf32> to vector<8x256xf32>
    %536 = arith.mulf %534, %535 : vector<8x256xf32>
    %c0_233 = arith.constant 0 : index
    %c8_234 = arith.constant 8 : index
    %c0_235 = arith.constant 0 : index
    %537 = vector.load %arg4[%c0_233, %c8_234, %c0_235] : memref<1x16x256xf32, #tpu.memory_space<vmem>>, vector<1x8x256xf32>
    %538 = vector.shape_cast %537 : vector<1x8x256xf32> to vector<8x256xf32>
    %539 = vector.shape_cast %536 : vector<8x256xf32> to vector<1x8x256xf32>
    tpu.vector_store %arg4[%c0_233, %c8_234, %c0_235], %539 {strides = array<i32>} : memref<1x16x256xf32, #tpu.memory_space<vmem>>, vector<1x8x256xf32>,
    return
  }
  func.func @transform_0(%arg0: i32, %arg1: memref<98xf32, #tpu.memory_space<smem>>) -> (i32, i32, i32) {
    %c0_i32 = arith.constant 0 : i32
    %c0_i32_0 = arith.constant 0 : i32
    %c0_i32_1 = arith.constant 0 : i32
    return %arg0, %c0_i32, %c0_i32_0 : i32, i32, i32
  }
  func.func @transform_1(%arg0: i32, %arg1: memref<98xf32, #tpu.memory_space<smem>>) -> (i32, i32) {
    %c0_i32 = arith.constant 0 : i32
    %c0_i32_0 = arith.constant 0 : i32
    %c0_i32_1 = arith.constant 0 : i32
    return %c0_i32, %c0_i32_0 : i32, i32
  }
  func.func @transform_2(%arg0: i32, %arg1: memref<98xf32, #tpu.memory_space<smem>>) -> (i32, i32, i32) {
    %c0_i32 = arith.constant 0 : i32
    %c0_i32_0 = arith.constant 0 : i32
    %c0_i32_1 = arith.constant 0 : i32
    return %arg0, %c0_i32, %c0_i32_0 : i32, i32, i32
  }
}

</mosaic_0001>

<llo_original>
// kernel: tpu_custom_call.1
$region0: #{tpu_custom_call.1}
  #allocation0 [shape = 'u32[]', space=smem, size = 0x4, offset = 0x4, fixed_abs, tag = 'smem constant byte address 0x4 - core index']
  #allocation1 [shape = 'u32[144,128]{1,0:T(1,128)}', space=vmem, size = 0x12000, scoped, tag = 'internal scratch']
  #allocation2 [shape = 'f32[1,384]{1,0:T(1,128)}', space=vmem, size = 0x600, scoped, tag = 'scratch operand']
  #allocation3 [shape = 'f32[1,384]{1,0:T(1,128)}', space=vmem, size = 0x600, scoped, tag = 'scratch operand']
  #allocation4 [shape = 's32[1]{0}', space=sflag, size = 0x4, scoped, tag = 'scoped memory for tpu_custom_call.1']
  #allocation5 [shape = 'u8[512]{0}', space=smem, size = 0x200, scoped, tag = 'prefetched SMEM operand 0']
  %s0 = inlined_call_operand.hbm [shape: f32[98], index: 0, kind: input, shape index: {}]
  %s1 = inlined_call_operand.hbm [shape: f32[2,16,256], index: 1, kind: input, shape index: {}]
  %s2 = inlined_call_operand.hbm [shape: f32[8,256], index: 2, kind: input, shape index: {}]
  %s3 = inlined_call_operand.hbm [shape: f32[2,16,256], index: 3, kind: output, shape index: {}]
  %s4 = sld [smem:[#allocation0]]
  $region49: #{tpu_custom_call.1} parent=0
    _
  %s6 = ssub.s32 1, %s4
  %s7 = scalar_select 0, %s6, %s4
  %9 = dma.hbm_to_smem %s0, 16, [#allocation5], [#allocation4]
  %10 = dma.done [#allocation4], 16
  %11 = sfence
  $region1: #{tpu_custom_call.1} parent=0
    #allocation6 [shape = 'u8[32768]{0}', space=vmem, size = 0x8000, scoped, tag = 'input window, operand 1']
    #allocation7 [shape = 's32[2]{0}', space=sflag, size = 0x8, scoped, tag = 'scoped memory for tpu_custom_call.1']
    #allocation8 [shape = 's32[2]{0}', space=sflag, size = 0x8, scoped, tag = 'scoped memory for tpu_custom_call.1']
    #allocation9 [shape = 'u8[8192]{0}', space=vmem, size = 0x2000, scoped, tag = 'input window, operand 2, single buffered']
    #allocation10 [shape = 's32[1]{0}', space=sflag, size = 0x4, scoped, tag = 'scoped memory for tpu_custom_call.1']
    #allocation11 [shape = 'u8[32768]{0}', space=vmem, size = 0x8000, scoped, tag = 'output window, operand 0']
    %12 = vsyncpa [#allocation7], 0
    %s13 = scalar_lea.sflag [#allocation7], 1
    %14 = vsyncpa %s13, 0
    %15 = vsyncpa [#allocation10], 0
    %16 = vsyncpa [#allocation8], 0
    %s17 = scalar_lea.sflag [#allocation8], 1
    %18 = vsyncpa %s17, 0
    loop: start=0, step=1, limit=4
    $region2: #{tpu_custom_call.1} parent=1 // loop_pre_header
      _
    $region3: #{tpu_custom_call.1} parent=1 // loop_header
      %s20 = sphi 0, %s24
      %p21 = scmp.ge.s32.totalorder %s20, 4
      %s30 = sphi 0, %s32
      %s33 = sphi 0, %s30
      %s34 = sphi 0, %s33
      %s50 = sphi 0, %s34
      %s54 = sphi 0, %s54
      %s56 = sphi 0, %s54
      %s57 = sphi 0, %s56
      %s71 = sphi 0, %s57
      %s77 = sphi 0, %s79
      %s80 = sphi 0, %s77
      %s81 = sphi 0, %s80
      %s97 = sphi 0, %s81
    $region4: #{tpu_custom_call.1} parent=1 // loop_header_branch
      %23 = sbr.rel (%p21) target = $region8
    $region5: #{tpu_custom_call.1} parent=1 // loop_body
      %s25 = ssub.s32 %s20, 1
      %s26 = ssub.s32 %s20, 2
      %s27 = sadd.s32 %s20, 1
      %s28 = ssub.s32 %s20, %s27
      %p29 = scmp.eq.s32.totalorder %s28, 0
      %s31 = sadd.s32 %s30, 1
      %s32 = scalar_select %p29, %s30, %s31
      %p35 = pneg %p29
      %p36 = scmp.eq.s32.totalorder %s20, 1
      %p37 = por %p35, %p36
      %p38 = scmp.ne.s32.totalorder %s30, %s33
      %p39 = scmp.eq.s32.totalorder %s20, 0
      %p40 = por %p38, %p39
      %p41 = scmp.ne.s32.totalorder %s30, %s33
      %p42 = scmp.eq.s32.totalorder %s25, 1
      %p43 = por %p41, %p42
      %p44 = scmp.ne.s32.totalorder %s33, %s34
      %p45 = scmp.eq.s32.totalorder %s25, 0
      %p46 = por %p44, %p45
      %p47 = scmp.ne.s32.totalorder %s33, %s34
      %p48 = scmp.eq.s32.totalorder %s26, 1
      %p49 = por %p47, %p48
      %p51 = scmp.ne.s32.totalorder %s34, %s50
      %p52 = scmp.eq.s32.totalorder %s26, 0
      %p53 = por %p51, %p52
      %s55 = sadd.s32 %s54, 1
      %p58 = scmp.eq.s32.totalorder %s20, 1
      %p59 = scmp.ne.s32.totalorder %s54, %s56
      %p60 = scmp.eq.s32.totalorder %s20, 0
      %p61 = por %p59, %p60
      %p62 = scmp.ne.s32.totalorder %s54, %s56
      %p63 = scmp.eq.s32.totalorder %s25, 1
      %p64 = por %p62, %p63
      %p65 = scmp.ne.s32.totalorder %s56, %s57
      %p66 = scmp.eq.s32.totalorder %s25, 0
      %p67 = por %p65, %p66
      %p68 = scmp.ne.s32.totalorder %s56, %s57
      %p69 = scmp.eq.s32.totalorder %s26, 1
      %p70 = por %p68, %p69
      %p72 = scmp.ne.s32.totalorder %s57, %s71
      %p73 = scmp.eq.s32.totalorder %s26, 0
      %p74 = por %p72, %p73
      %s75 = ssub.s32 %s20, %s27
      %p76 = scmp.eq.s32.totalorder %s75, 0
      %s78 = sadd.s32 %s77, 1
      %s79 = scalar_select %p76, %s77, %s78
      %p82 = pneg %p76
      %p83 = scmp.eq.s32.totalorder %s20, 1
      %p84 = por %p82, %p83
      %p85 = scmp.ne.s32.totalorder %s77, %s80
      %p86 = scmp.eq.s32.totalorder %s20, 0
      %p87 = por %p85, %p86
      %p88 = scmp.ne.s32.totalorder %s77, %s80
      %p89 = scmp.eq.s32.totalorder %s25, 1
      %p90 = por %p88, %p89
      %p91 = scmp.ne.s32.totalorder %s80, %s81
      %p92 = scmp.eq.s32.totalorder %s25, 0
      %p93 = por %p91, %p92
      %p94 = scmp.ne.s32.totalorder %s80, %s81
      %p95 = scmp.eq.s32.totalorder %s26, 1
      %p96 = por %p94, %p95
      %p98 = scmp.ne.s32.totalorder %s81, %s97
      %p99 = scmp.eq.s32.totalorder %s26, 0
      %p100 = por %p98, %p99
      %p101 = scmp.le.s32.totalorder 1, %s20
      %p102 = scmp.lt.s32.totalorder %s20, 3
      %p103 = pnand %p101, %p102
      %p104 = pneg %p103
      // Predicated region
      $region9: #{tpu_custom_call.1} parent=5 // pred_check
        _
      $region10: #{tpu_custom_call.1} parent=5 // pred_check_branch
        %106 = sbr.rel (%p103) target = $region12
      $region11: #{tpu_custom_call.1} parent=5 // pred_region
        %s107 = ssub.s32 %s20, 1
        // Predicated region
        $region13: #{tpu_custom_call.1} parent=11 // pred_check
          %p108 = pneg %p67
        $region14: #{tpu_custom_call.1} parent=11 // pred_check_branch
          %110 = sbr.rel (%p108) target = $region16
        $region15: #{tpu_custom_call.1} parent=11 // pred_region
          %s112 = ssub.s32 256, 256
          %113 = vsyncadd [#allocation10], %s112
          %s115 = sshll.u32 [#allocation9], 4
          %s116 = int_to_ptr.vmem [resolvable:$true] %s115
          %118 = dma.hbm_to_vmem [thread:$0]  %s2, 256, %s116, [#allocation10]
        $region16: #{tpu_custom_call.1} parent=11 // pred_fallthru
          _
      $region12: #{tpu_custom_call.1} parent=5 // pred_fallthru
        _
      %p119 = scmp.lt.s32.totalorder %s20, 2
      // Predicated region
      $region17: #{tpu_custom_call.1} parent=5 // pred_check
        %p120 = pneg %p119
      $region18: #{tpu_custom_call.1} parent=5 // pred_check_branch
        %122 = sbr.rel (%p120) target = $region20
      $region19: #{tpu_custom_call.1} parent=5 // pred_region
        // Predicated region
        $region21: #{tpu_custom_call.1} parent=19 // pred_check
          %p123 = pneg %p40
        $region22: #{tpu_custom_call.1} parent=19 // pred_check_branch
          %125 = sbr.rel (%p123) target = $region24
        $region23: #{tpu_custom_call.1} parent=19 // pred_region
          %s126 = sand.u32 %s30, 1
          %s127 = scalar_lea.sflag [#allocation7], %s126
          %s128 = sand.u32 %s30, 1
          %s129 = smul.addr %s128, 32
          %s130 = scalar_lea.vmem [#allocation6], %s129
          %s132 = ssub.s32 512, 512
          %133 = vsyncadd %s127, %s132
          %s134 = smul.addr %s20, 4
          %s135 = smul.addr %s134, 128
          %s136 = scalar_lea.hbm %s1, %s135
          %s137 = sshll.u32 %s130, 4
          %s138 = int_to_ptr.vmem [resolvable:$true] %s137
          %143 = dma.hbm_to_vmem [thread:$0]  %s136, 512, %s138, %s127, 256, 256, 16
        $region24: #{tpu_custom_call.1} parent=19 // pred_fallthru
          _
      $region20: #{tpu_custom_call.1} parent=5 // pred_fallthru
        _
      %p144 = scmp.le.s32.totalorder 1, %s20
      %p145 = scmp.lt.s32.totalorder %s20, 3
      %p146 = pnand %p144, %p145
      %p147 = pneg %p146
      // Predicated region
      $region25: #{tpu_custom_call.1} parent=5 // pred_check
        _
      $region26: #{tpu_custom_call.1} parent=5 // pred_check_branch
        %149 = sbr.rel (%p146) target = $region28
      $region27: #{tpu_custom_call.1} parent=5 // pred_region
        %s150 = ssub.s32 %s20, 1
        %s151 = sand.u32 %s33, 1
        %s152 = scalar_lea.sflag [#allocation7], %s151
        %s153 = sand.u32 %s33, 1
        %s154 = smul.addr %s153, 32
        %s155 = scalar_lea.vmem [#allocation6], %s154
        // Predicated region
        $region29: #{tpu_custom_call.1} parent=27 // pred_check
          %p156 = pneg %p46
        $region30: #{tpu_custom_call.1} parent=27 // pred_check_branch
          %158 = sbr.rel (%p156) target = $region32
        $region31: #{tpu_custom_call.1} parent=27 // pred_region
          %159 = dma.done %s152, 512
        $region32: #{tpu_custom_call.1} parent=27 // pred_fallthru
          _
        // Predicated region
        $region33: #{tpu_custom_call.1} parent=27 // pred_check
          %p160 = pneg %p67
        $region34: #{tpu_custom_call.1} parent=27 // pred_check_branch
          %162 = sbr.rel (%p160) target = $region36
        $region35: #{tpu_custom_call.1} parent=27 // pred_region
          %163 = dma.done [#allocation10], 256
        $region36: #{tpu_custom_call.1} parent=27 // pred_fallthru
          _
        %s164 = sand.u32 %s33, 1
        %s165 = scalar_lea.sflag [#allocation7], %s164
        %s166 = sand.u32 %s33, 1
        %s167 = smul.addr %s166, 32
        %s168 = scalar_lea.vmem [#allocation6], %s167
        %p169 = pneg %p46
        %p170 = pneg %p43
        %p171 = pneg %p67
        %p172 = pneg %p64
        %p173 = pneg %p93
        %p174 = pneg %p90
        %s175 = sand.u32 %s80, 1
        %s176 = scalar_lea.sflag [#allocation8], %s175
        %s177 = sand.u32 %s80, 1
        %s178 = smul.addr %s177, 32
        %s179 = scalar_lea.vmem [#allocation11], %s178
        %v180 = vld [vmem:[%s155] sm:$0xff]
        %v181 = vld [vmem:[%s155 + $0x8] sm:$0xff]
        %v182 = vld [vmem:[%s155 + $0x10] sm:$0xff]
        %v183 = vld [vmem:[%s155 + $0x18] sm:$0xff]
        %v184 = vadd.f32 %v180, %v182
        %v185 = vadd.f32 %v181, %v183
        %v186 = vmax.f32 %v180, %v182
        %v187 = vmax.f32 %v181, %v183
        %v188 = vrot.slane %v184, 4
        %v189 = vadd.f32 %v184, %v188
        %v190 = vrot.slane %v189, 2
        %v191 = vadd.f32 %v189, %v190
        %v192 = vrot.slane %v191, 1
        %v193 = vadd.f32 %v191, %v192
        %v194 = vrot.slane %v185, 4
        %v195 = vadd.f32 %v185, %v194
        %v196 = vrot.slane %v195, 2
        %v197 = vadd.f32 %v195, %v196
        %v198 = vrot.slane %v197, 1
        %v199 = vadd.f32 %v197, %v198
        %v200 = vmul.f32 %v193, 0.0625
        %v201 = vmul.f32 %v199, 0.0625
        %v202 = vrot.slane %v186, 4
        %v203 = vmax.f32 %v186, %v202
        %v204 = vrot.slane %v203, 2
        %v205 = vmax.f32 %v203, %v204
        %v206 = vrot.slane %v205, 1
        %v207 = vmax.f32 %v205, %v206
        %v208 = vrot.slane %v187, 4
        %v209 = vmax.f32 %v187, %v208
        %v210 = vrot.slane %v209, 2
        %v211 = vmax.f32 %v209, %v210
        %v212 = vrot.slane %v211, 1
        %v213 = vmax.f32 %v211, %v212
        %v214 = vlaneseq
        %vm215 = vcmp.ge.s32.totalorder %v214, 0
        %vm216 = vcmp.lt.s32.totalorder %v214, 384
        %vm217 = vmand %vm215, %vm216
        %218 = vst.msk [vmem:[#allocation2] sm:$0x7] %vm217, 0.0
        %219 = vst.msk [vmem:[#allocation3] sm:$0x7] %vm217, 0.0
        %v222 = vcombine.low %v200, %v201
        %v224 = vunpack.c.l.s4 1966171168
        %v225 = vunpack.c.0.s8 %v224
        %v226 = vlaneseq
        %v227 = vshrl.u32 %v226, 7
        %v228 = vsub.s32 %v225, %v227
        %v229 = vrot.slane %v222, %v228
        %v231 = vunpack.c.l.s4 1966171168
        %v232 = vunpack.c.0.s8 %v231
        %v233 = vlaneseq
        %v234 = vshrl.u32 %v233, 7
        %v235 = vsub.s32 %v232, %v234
        %v236 = vrot.slane %v229, %v235
        %237 = vrot.lane.b32.xlu0 %v236, 51
        %v238 = vpop.permute.xlu0 %237
        %v239 = vrot.slane %v238, 7
        %vm240 = vcmask 416768
        %v241 = vsel %vm240, %v239, %v238
        %vm243 = vcmp.ge.s32.totalorder %v214, 51
        %vm244 = vcmp.lt.s32.totalorder %v214, 307
        %vm245 = vmand %vm243, %vm244
        %246 = vst.msk [vmem:[#allocation2] sm:$0x7] %vm245, %v241
        %v249 = vcombine.low %v207, %v213
        %v251 = vunpack.c.l.s4 1966171168
        %v252 = vunpack.c.0.s8 %v251
        %v253 = vlaneseq
        %v254 = vshrl.u32 %v253, 7
        %v255 = vsub.s32 %v252, %v254
        %v256 = vrot.slane %v249, %v255
        %v258 = vunpack.c.l.s4 1966171168
        %v259 = vunpack.c.0.s8 %v258
        %v260 = vlaneseq
        %v261 = vshrl.u32 %v260, 7
        %v262 = vsub.s32 %v259, %v261
        %v263 = vrot.slane %v256, %v262
        %264 = vrot.lane.b32.xlu0 %v263, 51
        %v265 = vpop.permute.xlu0 %264
        %v266 = vrot.slane %v265, 7
        %v267 = vsel %vm240, %v266, %v265
        %269 = vst.msk [vmem:[#allocation3] sm:$0x7] %vm245, %v267
        %s270 = sld [smem:[#allocation5]]
        %v271 = vld [vmem:[#allocation2] sm:$0x3]
        %v272 = vstv %s270
        %v273 = vmul.f32 %v272, %v271
        %s274 = sld [smem:[#allocation5 + $0x7]]
        %v275 = vld [vmem:[#allocation2] sm:$0x7]
        %v276 = vstv %s274
        %v277 = vmul.f32 %v276, %v275
        %279 = vrot.lane.b32.xlu0 %v277, 112
        %v280 = vpop.permute.xlu0 %279
        %v281 = vrot.slane %v280, 1
        %vm282 = vcmask 916480
        %v283 = vsel %vm282, %v280, %v281
        %v285 = vadd.f32 %v273, %v283
        %s286 = sld [smem:[#allocation5 + $0xe]]
        %v287 = vstv %s286
        %v288 = vmul.f32 %v287, %v275
        %290 = vrot.lane.b32.xlu0 %v288, 96
        %v291 = vpop.permute.xlu0 %290
        %v292 = vrot.slane %v291, 1
        %vm293 = vcmask 785408
        %v294 = vsel %vm293, %v291, %v292
        %v296 = vadd.f32 %v285, %v294
        %s297 = sld [smem:[#allocation5 + $0x15]]
        %v298 = vstv %s297
        %v299 = vmul.f32 %v298, %v275
        %301 = vrot.lane.b32.xlu0 %v299, 80
        %v302 = vpop.permute.xlu0 %301
        %v303 = vrot.slane %v302, 1
        %vm304 = vcmask 654336
        %v305 = vsel %vm304, %v302, %v303
        %v307 = vadd.f32 %v296, %v305
        %s308 = sld [smem:[#allocation5 + $0x1c]]
        %v309 = vstv %s308
        %v310 = vmul.f32 %v309, %v275
        %312 = vrot.lane.b32.xlu0 %v310, 64
        %v313 = vpop.permute.xlu0 %312
        %v314 = vrot.slane %v313, 1
        %vm315 = vcmask 523264
        %v316 = vsel %vm315, %v313, %v314
        %v318 = vadd.f32 %v307, %v316
        %s319 = sld [smem:[#allocation5 + $0x23]]
        %v320 = vstv %s319
        %v321 = vmul.f32 %v320, %v275
        %323 = vrot.lane.b32.xlu0 %v321, 48
        %v324 = vpop.permute.xlu0 %323
        %v325 = vrot.slane %v324, 1
        %vm326 = vcmask 392192
        %v327 = vsel %vm326, %v324, %v325
        %v329 = vadd.f32 %v318, %v327
        %s330 = sld [smem:[#allocation5 + $0x2a]]
        %v331 = vstv %s330
        %v332 = vmul.f32 %v331, %v275
        %334 = vrot.lane.b32.xlu0 %v332, 32
        %v335 = vpop.permute.xlu0 %334
        %v336 = vrot.slane %v335, 1
        %vm337 = vcmask 261120
        %v338 = vsel %vm337, %v335, %v336
        %v340 = vadd.f32 %v329, %v338
        %s341 = sld [smem:[#allocation5 + $0x31]]
        %v342 = vld [vmem:[#allocation3] sm:$0x3]
        %v343 = vstv %s341
        %v344 = vmul.f32 %v343, %v342
        %v345 = vadd.f32 %v340, %v344
        %s346 = sld [smem:[#allocation5 + $0x38]]
        %v347 = vld [vmem:[#allocation3] sm:$0x7]
        %v348 = vstv %s346
        %v349 = vmul.f32 %v348, %v347
        %351 = vrot.lane.b32.xlu0 %v349, 112
        %v352 = vpop.permute.xlu0 %351
        %v353 = vrot.slane %v352, 1
        %v354 = vsel %vm282, %v352, %v353
        %v356 = vadd.f32 %v345, %v354
        %s357 = sld [smem:[#allocation5 + $0x3f]]
        %v358 = vstv %s357
        %v359 = vmul.f32 %v358, %v347
        %361 = vrot.lane.b32.xlu0 %v359, 96
        %v362 = vpop.permute.xlu0 %361
        %v363 = vrot.slane %v362, 1
        %v364 = vsel %vm293, %v362, %v363
        %v366 = vadd.f32 %v356, %v364
        %s367 = sld [smem:[#allocation5 + $0x46]]
        %v368 = vstv %s367
        %v369 = vmul.f32 %v368, %v347
        %371 = vrot.lane.b32.xlu0 %v369, 80
        %v372 = vpop.permute.xlu0 %371
        %v373 = vrot.slane %v372, 1
        %v374 = vsel %vm304, %v372, %v373
        %v376 = vadd.f32 %v366, %v374
        %s377 = sld [smem:[#allocation5 + $0x4d]]
        %v378 = vstv %s377
        %v379 = vmul.f32 %v378, %v347
        %381 = vrot.lane.b32.xlu0 %v379, 64
        %v382 = vpop.permute.xlu0 %381
        %v383 = vrot.slane %v382, 1
        %v384 = vsel %vm315, %v382, %v383
        %v386 = vadd.f32 %v376, %v384
        %s387 = sld [smem:[#allocation5 + $0x54]]
        %v388 = vstv %s387
        %v389 = vmul.f32 %v388, %v347
        %391 = vrot.lane.b32.xlu0 %v389, 48
        %v392 = vpop.permute.xlu0 %391
        %v393 = vrot.slane %v392, 1
        %v394 = vsel %vm326, %v392, %v393
        %v396 = vadd.f32 %v386, %v394
        %s397 = sld [smem:[#allocation5 + $0x5b]]
        %v398 = vstv %s397
        %v399 = vmul.f32 %v398, %v347
        %401 = vrot.lane.b32.xlu0 %v399, 32
        %v402 = vpop.permute.xlu0 %401
        %v403 = vrot.slane %v402, 1
        %v404 = vsel %vm337, %v402, %v403
        %v406 = vadd.f32 %v396, %v404
        %v407 = vld [vmem:[#allocation9] ss:$8 sm:$0x3]
        %v408 = vmul.f32 %v406, %v407
        %s409 = sld [smem:[#allocation5 + $0x1]]
        %v410 = vstv %s409
        %v411 = vmul.f32 %v410, %v275
        %s412 = sld [smem:[#allocation5 + $0x8]]
        %v413 = vstv %s412
        %v414 = vmul.f32 %v413, %v275
        %416 = vrot.lane.b32.xlu0 %v414, 112
        %v417 = vpop.permute.xlu0 %416
        %v418 = vrot.slane %v417, 1
        %v419 = vsel %vm282, %v417, %v418
        %v421 = vadd.f32 %v411, %v419
        %s422 = sld [smem:[#allocation5 + $0xf]]
        %v423 = vstv %s422
        %v424 = vmul.f32 %v423, %v275
        %426 = vrot.lane.b32.xlu0 %v424, 96
        %v427 = vpop.permute.xlu0 %426
        %v428 = vrot.slane %v427, 1
        %v429 = vsel %vm293, %v427, %v428
        %v431 = vadd.f32 %v421, %v429
        %s432 = sld [smem:[#allocation5 + $0x16]]
        %v433 = vstv %s432
        %v434 = vmul.f32 %v433, %v275
        %436 = vrot.lane.b32.xlu0 %v434, 80
        %v437 = vpop.permute.xlu0 %436
        %v438 = vrot.slane %v437, 1
        %v439 = vsel %vm304, %v437, %v438
        %v441 = vadd.f32 %v431, %v439
        %s442 = sld [smem:[#allocation5 + $0x1d]]
        %v443 = vstv %s442
        %v444 = vmul.f32 %v443, %v275
        %446 = vrot.lane.b32.xlu0 %v444, 64
        %v447 = vpop.permute.xlu0 %446
        %v448 = vrot.slane %v447, 1
        %v449 = vsel %vm315, %v447, %v448
        %v451 = vadd.f32 %v441, %v449
        %s452 = sld [smem:[#allocation5 + $0x24]]
        %v453 = vstv %s452
        %v454 = vmul.f32 %v453, %v275
        %456 = vrot.lane.b32.xlu0 %v454, 48
        %v457 = vpop.permute.xlu0 %456
        %v458 = vrot.slane %v457, 1
        %v459 = vsel %vm326, %v457, %v458
        %v461 = vadd.f32 %v451, %v459
        %s462 = sld [smem:[#allocation5 + $0x2b]]
        %v463 = vstv %s462
        %v464 = vmul.f32 %v463, %v275
        %466 = vrot.lane.b32.xlu0 %v464, 32
        %v467 = vpop.permute.xlu0 %466
        %v468 = vrot.slane %v467, 1
        %v469 = vsel %vm337, %v467, %v468
        %v471 = vadd.f32 %v461, %v469
        %s472 = sld [smem:[#allocation5 + $0x32]]
        %v473 = vstv %s472
        %v474 = vmul.f32 %v473, %v347
        %v475 = vadd.f32 %v471, %v474
        %s476 = sld [smem:[#allocation5 + $0x39]]
        %v477 = vstv %s476
        %v478 = vmul.f32 %v477, %v347
        %480 = vrot.lane.b32.xlu0 %v478, 112
        %v481 = vpop.permute.xlu0 %480
        %v482 = vrot.slane %v481, 1
        %v483 = vsel %vm282, %v481, %v482
        %v485 = vadd.f32 %v475, %v483
        %s486 = sld [smem:[#allocation5 + $0x40]]
        %v487 = vstv %s486
        %v488 = vmul.f32 %v487, %v347
        %490 = vrot.lane.b32.xlu0 %v488, 96
        %v491 = vpop.permute.xlu0 %490
        %v492 = vrot.slane %v491, 1
        %v493 = vsel %vm293, %v491, %v492
        %v495 = vadd.f32 %v485, %v493
        %s496 = sld [smem:[#allocation5 + $0x47]]
        %v497 = vstv %s496
        %v498 = vmul.f32 %v497, %v347
        %500 = vrot.lane.b32.xlu0 %v498, 80
        %v501 = vpop.permute.xlu0 %500
        %v502 = vrot.slane %v501, 1
        %v503 = vsel %vm304, %v501, %v502
        %v505 = vadd.f32 %v495, %v503
        %s506 = sld [smem:[#allocation5 + $0x4e]]
        %v507 = vstv %s506
        %v508 = vmul.f32 %v507, %v347
        %510 = vrot.lane.b32.xlu0 %v508, 64
        %v511 = vpop.permute.xlu0 %510
        %v512 = vrot.slane %v511, 1
        %v513 = vsel %vm315, %v511, %v512
        %v515 = vadd.f32 %v505, %v513
        %s516 = sld [smem:[#allocation5 + $0x55]]
        %v517 = vstv %s516
        %v518 = vmul.f32 %v517, %v347
        %520 = vrot.lane.b32.xlu0 %v518, 48
        %v521 = vpop.permute.xlu0 %520
        %v522 = vrot.slane %v521, 1
        %v523 = vsel %vm326, %v521, %v522
        %v525 = vadd.f32 %v515, %v523
        %s526 = sld [smem:[#allocation5 + $0x5c]]
        %v527 = vstv %s526
        %v528 = vmul.f32 %v527, %v347
        %530 = vrot.lane.b32.xlu0 %v528, 32
        %v531 = vpop.permute.xlu0 %530
        %v532 = vrot.slane %v531, 1
        %v533 = vsel %vm337, %v531, %v532
        %v535 = vadd.f32 %v525, %v533
        %s536 = scalar_lea.vmem [#allocation9], 1
        %v537 = vld [vmem:[%s536] ss:$8 sm:$0x3]
        %539 = vrot.lane.b32.xlu0 %v537, 1
        %v540 = vpop.permute.xlu0 %539
        %v541 = vrot.slane %v540, 7
        %vm542 = vcmask 7168
        %v543 = vsel %vm542, %v541, %v540
        %v545 = vmul.f32 %v535, %v543
        %547 = vrot.lane.b32.xlu0 %v545, 127
        %v548 = vpop.permute.xlu0 %547
        %v549 = vrot.slane %v548, 1
        %vm550 = vcmask 1039360
        %v551 = vsel %vm550, %v548, %v549
        %v553 = vadd.f32 %v408, %v551
        %s554 = sld [smem:[#allocation5 + $0x2]]
        %v555 = vstv %s554
        %v556 = vmul.f32 %v555, %v275
        %s557 = sld [smem:[#allocation5 + $0x9]]
        %v558 = vstv %s557
        %v559 = vmul.f32 %v558, %v275
        %561 = vrot.lane.b32.xlu0 %v559, 112
        %v562 = vpop.permute.xlu0 %561
        %v563 = vrot.slane %v562, 1
        %v564 = vsel %vm282, %v562, %v563
        %v566 = vadd.f32 %v556, %v564
        %s567 = sld [smem:[#allocation5 + $0x10]]
        %v568 = vstv %s567
        %v569 = vmul.f32 %v568, %v275
        %571 = vrot.lane.b32.xlu0 %v569, 96
        %v572 = vpop.permute.xlu0 %571
        %v573 = vrot.slane %v572, 1
        %v574 = vsel %vm293, %v572, %v573
        %v576 = vadd.f32 %v566, %v574
        %s577 = sld [smem:[#allocation5 + $0x17]]
        %v578 = vstv %s577
        %v579 = vmul.f32 %v578, %v275
        %581 = vrot.lane.b32.xlu0 %v579, 80
        %v582 = vpop.permute.xlu0 %581
        %v583 = vrot.slane %v582, 1
        %v584 = vsel %vm304, %v582, %v583
        %v586 = vadd.f32 %v576, %v584
        %s587 = sld [smem:[#allocation5 + $0x1e]]
        %v588 = vstv %s587
        %v589 = vmul.f32 %v588, %v275
        %591 = vrot.lane.b32.xlu0 %v589, 64
        %v592 = vpop.permute.xlu0 %591
        %v593 = vrot.slane %v592, 1
        %v594 = vsel %vm315, %v592, %v593
        %v596 = vadd.f32 %v586, %v594
        %s597 = sld [smem:[#allocation5 + $0x25]]
        %v598 = vstv %s597
        %v599 = vmul.f32 %v598, %v275
        %601 = vrot.lane.b32.xlu0 %v599, 48
        %v602 = vpop.permute.xlu0 %601
        %v603 = vrot.slane %v602, 1
        %v604 = vsel %vm326, %v602, %v603
        %v606 = vadd.f32 %v596, %v604
        %s607 = sld [smem:[#allocation5 + $0x2c]]
        %v608 = vstv %s607
        %v609 = vmul.f32 %v608, %v275
        %611 = vrot.lane.b32.xlu0 %v609, 32
        %v612 = vpop.permute.xlu0 %611
        %v613 = vrot.slane %v612, 1
        %v614 = vsel %vm337, %v612, %v613
        %v616 = vadd.f32 %v606, %v614
        %s617 = sld [smem:[#allocation5 + $0x33]]
        %v618 = vstv %s617
        %v619 = vmul.f32 %v618, %v347
        %v620 = vadd.f32 %v616, %v619
        %s621 = sld [smem:[#allocation5 + $0x3a]]
        %v622 = vstv %s621
        %v623 = vmul.f32 %v622, %v347
        %625 = vrot.lane.b32.xlu0 %v623, 112
        %v626 = vpop.permute.xlu0 %625
        %v627 = vrot.slane %v626, 1
        %v628 = vsel %vm282, %v626, %v627
        %v630 = vadd.f32 %v620, %v628
        %s631 = sld [smem:[#allocation5 + $0x41]]
        %v632 = vstv %s631
        %v633 = vmul.f32 %v632, %v347
        %635 = vrot.lane.b32.xlu0 %v633, 96
        %v636 = vpop.permute.xlu0 %635
        %v637 = vrot.slane %v636, 1
        %v638 = vsel %vm293, %v636, %v637
        %v640 = vadd.f32 %v630, %v638
        %s641 = sld [smem:[#allocation5 + $0x48]]
        %v642 = vstv %s641
        %v643 = vmul.f32 %v642, %v347
        %645 = vrot.lane.b32.xlu0 %v643, 80
        %v646 = vpop.permute.xlu0 %645
        %v647 = vrot.slane %v646, 1
        %v648 = vsel %vm304, %v646, %v647
        %v650 = vadd.f32 %v640, %v648
        %s651 = sld [smem:[#allocation5 + $0x4f]]
        %v652 = vstv %s651
        %v653 = vmul.f32 %v652, %v347
        %655 = vrot.lane.b32.xlu0 %v653, 64
        %v656 = vpop.permute.xlu0 %655
        %v657 = vrot.slane %v656, 1
        %v658 = vsel %vm315, %v656, %v657
        %v660 = vadd.f32 %v650, %v658
        %s661 = sld [smem:[#allocation5 + $0x56]]
        %v662 = vstv %s661
        %v663 = vmul.f32 %v662, %v347
        %665 = vrot.lane.b32.xlu0 %v663, 48
        %v666 = vpop.permute.xlu0 %665
        %v667 = vrot.slane %v666, 1
        %v668 = vsel %vm326, %v666, %v667
        %v670 = vadd.f32 %v660, %v668
        %s671 = sld [smem:[#allocation5 + $0x5d]]
        %v672 = vstv %s671
        %v673 = vmul.f32 %v672, %v347
        %675 = vrot.lane.b32.xlu0 %v673, 32
        %v676 = vpop.permute.xlu0 %675
        %v677 = vrot.slane %v676, 1
        %v678 = vsel %vm337, %v676, %v677
        %v680 = vadd.f32 %v670, %v678
        %s681 = scalar_lea.vmem [#allocation9], 2
        %v682 = vld [vmem:[%s681] ss:$8 sm:$0x3]
        %684 = vrot.lane.b32.xlu0 %v682, 2
        %v685 = vpop.permute.xlu0 %684
        %v686 = vrot.slane %v685, 7
        %vm687 = vcmask 15360
        %v688 = vsel %vm687, %v686, %v685
        %v690 = vmul.f32 %v680, %v688
        %692 = vrot.lane.b32.xlu0 %v690, 126
        %v693 = vpop.permute.xlu0 %692
        %v694 = vrot.slane %v693, 1
        %vm695 = vcmask 1031168
        %v696 = vsel %vm695, %v693, %v694
        %v698 = vadd.f32 %v553, %v696
        %s699 = sld [smem:[#allocation5 + $0x3]]
        %v700 = vstv %s699
        %v701 = vmul.f32 %v700, %v275
        %s702 = sld [smem:[#allocation5 + $0xa]]
        %v703 = vstv %s702
        %v704 = vmul.f32 %v703, %v275
        %706 = vrot.lane.b32.xlu0 %v704, 112
        %v707 = vpop.permute.xlu0 %706
        %v708 = vrot.slane %v707, 1
        %v709 = vsel %vm282, %v707, %v708
        %v711 = vadd.f32 %v701, %v709
        %s712 = sld [smem:[#allocation5 + $0x11]]
        %v713 = vstv %s712
        %v714 = vmul.f32 %v713, %v275
        %716 = vrot.lane.b32.xlu0 %v714, 96
        %v717 = vpop.permute.xlu0 %716
        %v718 = vrot.slane %v717, 1
        %v719 = vsel %vm293, %v717, %v718
        %v721 = vadd.f32 %v711, %v719
        %s722 = sld [smem:[#allocation5 + $0x18]]
        %v723 = vstv %s722
        %v724 = vmul.f32 %v723, %v275
        %726 = vrot.lane.b32.xlu0 %v724, 80
        %v727 = vpop.permute.xlu0 %726
        %v728 = vrot.slane %v727, 1
        %v729 = vsel %vm304, %v727, %v728
        %v731 = vadd.f32 %v721, %v729
        %s732 = sld [smem:[#allocation5 + $0x1f]]
        %v733 = vstv %s732
        %v734 = vmul.f32 %v733, %v275
        %736 = vrot.lane.b32.xlu0 %v734, 64
        %v737 = vpop.permute.xlu0 %736
        %v738 = vrot.slane %v737, 1
        %v739 = vsel %vm315, %v737, %v738
        %v741 = vadd.f32 %v731, %v739
        %s742 = sld [smem:[#allocation5 + $0x26]]
        %v743 = vstv %s742
        %v744 = vmul.f32 %v743, %v275
        %746 = vrot.lane.b32.xlu0 %v744, 48
        %v747 = vpop.permute.xlu0 %746
        %v748 = vrot.slane %v747, 1
        %v749 = vsel %vm326, %v747, %v748
        %v751 = vadd.f32 %v741, %v749
        %s752 = sld [smem:[#allocation5 + $0x2d]]
        %v753 = vstv %s752
        %v754 = vmul.f32 %v753, %v275
        %756 = vrot.lane.b32.xlu0 %v754, 32
        %v757 = vpop.permute.xlu0 %756
        %v758 = vrot.slane %v757, 1
        %v759 = vsel %vm337, %v757, %v758
        %v761 = vadd.f32 %v751, %v759
        %s762 = sld [smem:[#allocation5 + $0x34]]
        %v763 = vstv %s762
        %v764 = vmul.f32 %v763, %v347
        %v765 = vadd.f32 %v761, %v764
        %s766 = sld [smem:[#allocation5 + $0x3b]]
        %v767 = vstv %s766
        %v768 = vmul.f32 %v767, %v347
        %770 = vrot.lane.b32.xlu0 %v768, 112
        %v771 = vpop.permute.xlu0 %770
        %v772 = vrot.slane %v771, 1
        %v773 = vsel %vm282, %v771, %v772
        %v775 = vadd.f32 %v765, %v773
        %s776 = sld [smem:[#allocation5 + $0x42]]
        %v777 = vstv %s776
        %v778 = vmul.f32 %v777, %v347
        %780 = vrot.lane.b32.xlu0 %v778, 96
        %v781 = vpop.permute.xlu0 %780
        %v782 = vrot.slane %v781, 1
        %v783 = vsel %vm293, %v781, %v782
        %v785 = vadd.f32 %v775, %v783
        %s786 = sld [smem:[#allocation5 + $0x49]]
        %v787 = vstv %s786
        %v788 = vmul.f32 %v787, %v347
        %790 = vrot.lane.b32.xlu0 %v788, 80
        %v791 = vpop.permute.xlu0 %790
        %v792 = vrot.slane %v791, 1
        %v793 = vsel %vm304, %v791, %v792
        %v795 = vadd.f32 %v785, %v793
        %s796 = sld [smem:[#allocation5 + $0x50]]
        %v797 = vstv %s796
        %v798 = vmul.f32 %v797, %v347
        %800 = vrot.lane.b32.xlu0 %v798, 64
        %v801 = vpop.permute.xlu0 %800
        %v802 = vrot.slane %v801, 1
        %v803 = vsel %vm315, %v801, %v802
        %v805 = vadd.f32 %v795, %v803
        %s806 = sld [smem:[#allocation5 + $0x57]]
        %v807 = vstv %s806
        %v808 = vmul.f32 %v807, %v347
        %810 = vrot.lane.b32.xlu0 %v808, 48
        %v811 = vpop.permute.xlu0 %810
        %v812 = vrot.slane %v811, 1
        %v813 = vsel %vm326, %v811, %v812
        %v815 = vadd.f32 %v805, %v813
        %s816 = sld [smem:[#allocation5 + $0x5e]]
        %v817 = vstv %s816
        %v818 = vmul.f32 %v817, %v347
        %820 = vrot.lane.b32.xlu0 %v818, 32
        %v821 = vpop.permute.xlu0 %820
        %v822 = vrot.slane %v821, 1
        %v823 = vsel %vm337, %v821, %v822
        %v825 = vadd.f32 %v815, %v823
        %s826 = scalar_lea.vmem [#allocation9], 3
        %v827 = vld [vmem:[%s826] ss:$8 sm:$0x3]
        %829 = vrot.lane.b32.xlu0 %v827, 3
        %v830 = vpop.permute.xlu0 %829
        %v831 = vrot.slane %v830, 7
        %vm832 = vcmask 23552
        %v833 = vsel %vm832, %v831, %v830
        %v835 = vmul.f32 %v825, %v833
        %837 = vrot.lane.b32.xlu0 %v835, 125
        %v838 = vpop.permute.xlu0 %837
        %v839 = vrot.slane %v838, 1
        %vm840 = vcmask 1022976
        %v841 = vsel %vm840, %v838, %v839
        %v843 = vadd.f32 %v698, %v841
        %s844 = sld [smem:[#allocation5 + $0x4]]
        %v845 = vstv %s844
        %v846 = vmul.f32 %v845, %v275
        %s847 = sld [smem:[#allocation5 + $0xb]]
        %v848 = vstv %s847
        %v849 = vmul.f32 %v848, %v275
        %851 = vrot.lane.b32.xlu0 %v849, 112
        %v852 = vpop.permute.xlu0 %851
        %v853 = vrot.slane %v852, 1
        %v854 = vsel %vm282, %v852, %v853
        %v856 = vadd.f32 %v846, %v854
        %s857 = sld [smem:[#allocation5 + $0x12]]
        %v858 = vstv %s857
        %v859 = vmul.f32 %v858, %v275
        %861 = vrot.lane.b32.xlu0 %v859, 96
        %v862 = vpop.permute.xlu0 %861
        %v863 = vrot.slane %v862, 1
        %v864 = vsel %vm293, %v862, %v863
        %v866 = vadd.f32 %v856, %v864
        %s867 = sld [smem:[#allocation5 + $0x19]]
        %v868 = vstv %s867
        %v869 = vmul.f32 %v868, %v275
        %871 = vrot.lane.b32.xlu0 %v869, 80
        %v872 = vpop.permute.xlu0 %871
        %v873 = vrot.slane %v872, 1
        %v874 = vsel %vm304, %v872, %v873
        %v876 = vadd.f32 %v866, %v874
        %s877 = sld [smem:[#allocation5 + $0x20]]
        %v878 = vstv %s877
        %v879 = vmul.f32 %v878, %v275
        %881 = vrot.lane.b32.xlu0 %v879, 64
        %v882 = vpop.permute.xlu0 %881
        %v883 = vrot.slane %v882, 1
        %v884 = vsel %vm315, %v882, %v883
        %v886 = vadd.f32 %v876, %v884
        %s887 = sld [smem:[#allocation5 + $0x27]]
        %v888 = vstv %s887
        %v889 = vmul.f32 %v888, %v275
        %891 = vrot.lane.b32.xlu0 %v889, 48
        %v892 = vpop.permute.xlu0 %891
        %v893 = vrot.slane %v892, 1
        %v894 = vsel %vm326, %v892, %v893
        %v896 = vadd.f32 %v886, %v894
        %s897 = sld [smem:[#allocation5 + $0x2e]]
        %v898 = vstv %s897
        %v899 = vmul.f32 %v898, %v275
        %901 = vrot.lane.b32.xlu0 %v899, 32
        %v902 = vpop.permute.xlu0 %901
        %v903 = vrot.slane %v902, 1
        %v904 = vsel %vm337, %v902, %v903
        %v906 = vadd.f32 %v896, %v904
        %s907 = sld [smem:[#allocation5 + $0x35]]
        %v908 = vstv %s907
        %v909 = vmul.f32 %v908, %v347
        %v910 = vadd.f32 %v906, %v909
        %s911 = sld [smem:[#allocation5 + $0x3c]]
        %v912 = vstv %s911
        %v913 = vmul.f32 %v912, %v347
        %915 = vrot.lane.b32.xlu0 %v913, 112
        %v916 = vpop.permute.xlu0 %915
        %v917 = vrot.slane %v916, 1
        %v918 = vsel %vm282, %v916, %v917
        %v920 = vadd.f32 %v910, %v918
        %s921 = sld [smem:[#allocation5 + $0x43]]
        %v922 = vstv %s921
        %v923 = vmul.f32 %v922, %v347
        %925 = vrot.lane.b32.xlu0 %v923, 96
        %v926 = vpop.permute.xlu0 %925
        %v927 = vrot.slane %v926, 1
        %v928 = vsel %vm293, %v926, %v927
        %v930 = vadd.f32 %v920, %v928
        %s931 = sld [smem:[#allocation5 + $0x4a]]
        %v932 = vstv %s931
        %v933 = vmul.f32 %v932, %v347
        %935 = vrot.lane.b32.xlu0 %v933, 80
        %v936 = vpop.permute.xlu0 %935
        %v937 = vrot.slane %v936, 1
        %v938 = vsel %vm304, %v936, %v937
        %v940 = vadd.f32 %v930, %v938
        %s941 = sld [smem:[#allocation5 + $0x51]]
        %v942 = vstv %s941
        %v943 = vmul.f32 %v942, %v347
        %945 = vrot.lane.b32.xlu0 %v943, 64
        %v946 = vpop.permute.xlu0 %945
        %v947 = vrot.slane %v946, 1
        %v948 = vsel %vm315, %v946, %v947
        %v950 = vadd.f32 %v940, %v948
        %s951 = sld [smem:[#allocation5 + $0x58]]
        %v952 = vstv %s951
        %v953 = vmul.f32 %v952, %v347
        %955 = vrot.lane.b32.xlu0 %v953, 48
        %v956 = vpop.permute.xlu0 %955
        %v957 = vrot.slane %v956, 1
        %v958 = vsel %vm326, %v956, %v957
        %v960 = vadd.f32 %v950, %v958
        %s961 = sld [smem:[#allocation5 + $0x5f]]
        %v962 = vstv %s961
        %v963 = vmul.f32 %v962, %v347
        %965 = vrot.lane.b32.xlu0 %v963, 32
        %v966 = vpop.permute.xlu0 %965
        %v967 = vrot.slane %v966, 1
        %v968 = vsel %vm337, %v966, %v967
        %v970 = vadd.f32 %v960, %v968
        %s971 = scalar_lea.vmem [#allocation9], 4
        %v972 = vld [vmem:[%s971] ss:$8 sm:$0x3]
        %974 = vrot.lane.b32.xlu0 %v972, 4
        %v975 = vpop.permute.xlu0 %974
        %v976 = vrot.slane %v975, 7
        %vm977 = vcmask 31744
        %v978 = vsel %vm977, %v976, %v975
        %v980 = vmul.f32 %v970, %v978
        %982 = vrot.lane.b32.xlu0 %v980, 124
        %v983 = vpop.permute.xlu0 %982
        %v984 = vrot.slane %v983, 1
        %vm985 = vcmask 1014784
        %v986 = vsel %vm985, %v983, %v984
        %v988 = vadd.f32 %v843, %v986
        %s989 = sld [smem:[#allocation5 + $0x5]]
        %v990 = vstv %s989
        %v991 = vmul.f32 %v990, %v275
        %s992 = sld [smem:[#allocation5 + $0xc]]
        %v993 = vstv %s992
        %v994 = vmul.f32 %v993, %v275
        %996 = vrot.lane.b32.xlu0 %v994, 112
        %v997 = vpop.permute.xlu0 %996
        %v998 = vrot.slane %v997, 1
        %v999 = vsel %vm282, %v997, %v998
        %v1001 = vadd.f32 %v991, %v999
        %s1002 = sld [smem:[#allocation5 + $0x13]]
        %v1003 = vstv %s1002
        %v1004 = vmul.f32 %v1003, %v275
        %1006 = vrot.lane.b32.xlu0 %v1004, 96
        %v1007 = vpop.permute.xlu0 %1006
        %v1008 = vrot.slane %v1007, 1
        %v1009 = vsel %vm293, %v1007, %v1008
        %v1011 = vadd.f32 %v1001, %v1009
        %s1012 = sld [smem:[#allocation5 + $0x1a]]
        %v1013 = vstv %s1012
        %v1014 = vmul.f32 %v1013, %v275
        %1016 = vrot.lane.b32.xlu0 %v1014, 80
        %v1017 = vpop.permute.xlu0 %1016
        %v1018 = vrot.slane %v1017, 1
        %v1019 = vsel %vm304, %v1017, %v1018
        %v1021 = vadd.f32 %v1011, %v1019
        %s1022 = sld [smem:[#allocation5 + $0x21]]
        %v1023 = vstv %s1022
        %v1024 = vmul.f32 %v1023, %v275
        %1026 = vrot.lane.b32.xlu0 %v1024, 64
        %v1027 = vpop.permute.xlu0 %1026
        %v1028 = vrot.slane %v1027, 1
        %v1029 = vsel %vm315, %v1027, %v1028
        %v1031 = vadd.f32 %v1021, %v1029
        %s1032 = sld [smem:[#allocation5 + $0x28]]
        %v1033 = vstv %s1032
        %v1034 = vmul.f32 %v1033, %v275
        %1036 = vrot.lane.b32.xlu0 %v1034, 48
        %v1037 = vpop.permute.xlu0 %1036
        %v1038 = vrot.slane %v1037, 1
        %v1039 = vsel %vm326, %v1037, %v1038
        %v1041 = vadd.f32 %v1031, %v1039
        %s1042 = sld [smem:[#allocation5 + $0x2f]]
        %v1043 = vstv %s1042
        %v1044 = vmul.f32 %v1043, %v275
        %1046 = vrot.lane.b32.xlu0 %v1044, 32
        %v1047 = vpop.permute.xlu0 %1046
        %v1048 = vrot.slane %v1047, 1
        %v1049 = vsel %vm337, %v1047, %v1048
        %v1051 = vadd.f32 %v1041, %v1049
        %s1052 = sld [smem:[#allocation5 + $0x36]]
        %v1053 = vstv %s1052
        %v1054 = vmul.f32 %v1053, %v347
        %v1055 = vadd.f32 %v1051, %v1054
        %s1056 = sld [smem:[#allocation5 + $0x3d]]
        %v1057 = vstv %s1056
        %v1058 = vmul.f32 %v1057, %v347
        %1060 = vrot.lane.b32.xlu0 %v1058, 112
        %v1061 = vpop.permute.xlu0 %1060
        %v1062 = vrot.slane %v1061, 1
        %v1063 = vsel %vm282, %v1061, %v1062
        %v1065 = vadd.f32 %v1055, %v1063
        %s1066 = sld [smem:[#allocation5 + $0x44]]
        %v1067 = vstv %s1066
        %v1068 = vmul.f32 %v1067, %v347
        %1070 = vrot.lane.b32.xlu0 %v1068, 96
        %v1071 = vpop.permute.xlu0 %1070
        %v1072 = vrot.slane %v1071, 1
        %v1073 = vsel %vm293, %v1071, %v1072
        %v1075 = vadd.f32 %v1065, %v1073
        %s1076 = sld [smem:[#allocation5 + $0x4b]]
        %v1077 = vstv %s1076
        %v1078 = vmul.f32 %v1077, %v347
        %1080 = vrot.lane.b32.xlu0 %v1078, 80
        %v1081 = vpop.permute.xlu0 %1080
        %v1082 = vrot.slane %v1081, 1
        %v1083 = vsel %vm304, %v1081, %v1082
        %v1085 = vadd.f32 %v1075, %v1083
        %s1086 = sld [smem:[#allocation5 + $0x52]]
        %v1087 = vstv %s1086
        %v1088 = vmul.f32 %v1087, %v347
        %1090 = vrot.lane.b32.xlu0 %v1088, 64
        %v1091 = vpop.permute.xlu0 %1090
        %v1092 = vrot.slane %v1091, 1
        %v1093 = vsel %vm315, %v1091, %v1092
        %v1095 = vadd.f32 %v1085, %v1093
        %s1096 = sld [smem:[#allocation5 + $0x59]]
        %v1097 = vstv %s1096
        %v1098 = vmul.f32 %v1097, %v347
        %1100 = vrot.lane.b32.xlu0 %v1098, 48
        %v1101 = vpop.permute.xlu0 %1100
        %v1102 = vrot.slane %v1101, 1
        %v1103 = vsel %vm326, %v1101, %v1102
        %v1105 = vadd.f32 %v1095, %v1103
        %s1106 = sld [smem:[#allocation5 + $0x60]]
        %v1107 = vstv %s1106
        %v1108 = vmul.f32 %v1107, %v347
        %1110 = vrot.lane.b32.xlu0 %v1108, 32
        %v1111 = vpop.permute.xlu0 %1110
        %v1112 = vrot.slane %v1111, 1
        %v1113 = vsel %vm337, %v1111, %v1112
        %v1115 = vadd.f32 %v1105, %v1113
        %s1116 = scalar_lea.vmem [#allocation9], 5
        %v1117 = vld [vmem:[%s1116] ss:$8 sm:$0x3]
        %1119 = vrot.lane.b32.xlu0 %v1117, 5
        %v1120 = vpop.permute.xlu0 %1119
        %v1121 = vrot.slane %v1120, 7
        %vm1122 = vcmask 39936
        %v1123 = vsel %vm1122, %v1121, %v1120
        %v1125 = vmul.f32 %v1115, %v1123
        %1127 = vrot.lane.b32.xlu0 %v1125, 123
        %v1128 = vpop.permute.xlu0 %1127
        %v1129 = vrot.slane %v1128, 1
        %vm1130 = vcmask 1006592
        %v1131 = vsel %vm1130, %v1128, %v1129
        %v1133 = vadd.f32 %v988, %v1131
        %s1134 = sld [smem:[#allocation5 + $0x6]]
        %v1135 = vstv %s1134
        %v1136 = vmul.f32 %v1135, %v275
        %s1137 = sld [smem:[#allocation5 + $0xd]]
        %v1138 = vstv %s1137
        %v1139 = vmul.f32 %v1138, %v275
        %1141 = vrot.lane.b32.xlu0 %v1139, 112
        %v1142 = vpop.permute.xlu0 %1141
        %v1143 = vrot.slane %v1142, 1
        %v1144 = vsel %vm282, %v1142, %v1143
        %v1146 = vadd.f32 %v1136, %v1144
        %s1147 = sld [smem:[#allocation5 + $0x14]]
        %v1148 = vstv %s1147
        %v1149 = vmul.f32 %v1148, %v275
        %1151 = vrot.lane.b32.xlu0 %v1149, 96
        %v1152 = vpop.permute.xlu0 %1151
        %v1153 = vrot.slane %v1152, 1
        %v1154 = vsel %vm293, %v1152, %v1153
        %v1156 = vadd.f32 %v1146, %v1154
        %s1157 = sld [smem:[#allocation5 + $0x1b]]
        %v1158 = vstv %s1157
        %v1159 = vmul.f32 %v1158, %v275
        %1161 = vrot.lane.b32.xlu0 %v1159, 80
        %v1162 = vpop.permute.xlu0 %1161
        %v1163 = vrot.slane %v1162, 1
        %v1164 = vsel %vm304, %v1162, %v1163
        %v1166 = vadd.f32 %v1156, %v1164
        %s1167 = sld [smem:[#allocation5 + $0x22]]
        %v1168 = vstv %s1167
        %v1169 = vmul.f32 %v1168, %v275
        %1171 = vrot.lane.b32.xlu0 %v1169, 64
        %v1172 = vpop.permute.xlu0 %1171
        %v1173 = vrot.slane %v1172, 1
        %v1174 = vsel %vm315, %v1172, %v1173
        %v1176 = vadd.f32 %v1166, %v1174
        %s1177 = sld [smem:[#allocation5 + $0x29]]
        %v1178 = vstv %s1177
        %v1179 = vmul.f32 %v1178, %v275
        %1181 = vrot.lane.b32.xlu0 %v1179, 48
        %v1182 = vpop.permute.xlu0 %1181
        %v1183 = vrot.slane %v1182, 1
        %v1184 = vsel %vm326, %v1182, %v1183
        %v1186 = vadd.f32 %v1176, %v1184
        %s1187 = sld [smem:[#allocation5 + $0x30]]
        %v1188 = vstv %s1187
        %v1189 = vmul.f32 %v1188, %v275
        %1191 = vrot.lane.b32.xlu0 %v1189, 32
        %v1192 = vpop.permute.xlu0 %1191
        %v1193 = vrot.slane %v1192, 1
        %v1194 = vsel %vm337, %v1192, %v1193
        %v1196 = vadd.f32 %v1186, %v1194
        %s1197 = sld [smem:[#allocation5 + $0x37]]
        %v1198 = vstv %s1197
        %v1199 = vmul.f32 %v1198, %v347
        %v1200 = vadd.f32 %v1196, %v1199
        %s1201 = sld [smem:[#allocation5 + $0x3e]]
        %v1202 = vstv %s1201
        %v1203 = vmul.f32 %v1202, %v347
        %1205 = vrot.lane.b32.xlu0 %v1203, 112
        %v1206 = vpop.permute.xlu0 %1205
        %v1207 = vrot.slane %v1206, 1
        %v1208 = vsel %vm282, %v1206, %v1207
        %v1210 = vadd.f32 %v1200, %v1208
        %s1211 = sld [smem:[#allocation5 + $0x45]]
        %v1212 = vstv %s1211
        %v1213 = vmul.f32 %v1212, %v347
        %1215 = vrot.lane.b32.xlu0 %v1213, 96
        %v1216 = vpop.permute.xlu0 %1215
        %v1217 = vrot.slane %v1216, 1
        %v1218 = vsel %vm293, %v1216, %v1217
        %v1220 = vadd.f32 %v1210, %v1218
        %s1221 = sld [smem:[#allocation5 + $0x4c]]
        %v1222 = vstv %s1221
        %v1223 = vmul.f32 %v1222, %v347
        %1225 = vrot.lane.b32.xlu0 %v1223, 80
        %v1226 = vpop.permute.xlu0 %1225
        %v1227 = vrot.slane %v1226, 1
        %v1228 = vsel %vm304, %v1226, %v1227
        %v1230 = vadd.f32 %v1220, %v1228
        %s1231 = sld [smem:[#allocation5 + $0x53]]
        %v1232 = vstv %s1231
        %v1233 = vmul.f32 %v1232, %v347
        %1235 = vrot.lane.b32.xlu0 %v1233, 64
        %v1236 = vpop.permute.xlu0 %1235
        %v1237 = vrot.slane %v1236, 1
        %v1238 = vsel %vm315, %v1236, %v1237
        %v1240 = vadd.f32 %v1230, %v1238
        %s1241 = sld [smem:[#allocation5 + $0x5a]]
        %v1242 = vstv %s1241
        %v1243 = vmul.f32 %v1242, %v347
        %1245 = vrot.lane.b32.xlu0 %v1243, 48
        %v1246 = vpop.permute.xlu0 %1245
        %v1247 = vrot.slane %v1246, 1
        %v1248 = vsel %vm326, %v1246, %v1247
        %v1250 = vadd.f32 %v1240, %v1248
        %s1251 = sld [smem:[#allocation5 + $0x61]]
        %v1252 = vstv %s1251
        %v1253 = vmul.f32 %v1252, %v347
        %1255 = vrot.lane.b32.xlu0 %v1253, 32
        %v1256 = vpop.permute.xlu0 %1255
        %v1257 = vrot.slane %v1256, 1
        %v1258 = vsel %vm337, %v1256, %v1257
        %v1260 = vadd.f32 %v1250, %v1258
        %s1261 = scalar_lea.vmem [#allocation9], 6
        %v1262 = vld [vmem:[%s1261] ss:$8 sm:$0x3]
        %1264 = vrot.lane.b32.xlu0 %v1262, 6
        %v1265 = vpop.permute.xlu0 %1264
        %v1266 = vrot.slane %v1265, 7
        %vm1267 = vcmask 48128
        %v1268 = vsel %vm1267, %v1266, %v1265
        %v1270 = vmul.f32 %v1260, %v1268
        %1272 = vrot.lane.b32.xlu0 %v1270, 122
        %v1273 = vpop.permute.xlu0 %1272
        %v1274 = vrot.slane %v1273, 1
        %vm1275 = vcmask 998400
        %v1276 = vsel %vm1275, %v1273, %v1274
        %v1278 = vadd.f32 %v1133, %v1276
        %v1279 = vxor.u32 %v1278, 2147483648
        %v1280 = vmul.f32 %v1279, 1.442695
        %v1281 = vpow.pop %v1280
        %v1282 = vadd.f32 %v1281, 1.0
        %v1283 = vrcp.pop %v1282
        %v1284 = vmul.f32 1.0, %v1283
        %v1285 = vld [vmem:[%s155] sm:$0xff]
        %v1286 = vld [vmem:[%s155 + $0x8] sm:$0xff]
        %v1288 = vlaneseq
        %v1289 = vshrl.u32 %v1288, 7
        %v1290 = vsub.s32 0, %v1289
        %v1291 = vrot.slane %v1284, %v1290
        %v1292 = vlaneseq
        %v1293 = vshrl.u32 %v1292, 7
        %v1294 = vsub.s32 1, %v1293
        %v1295 = vrot.slane %v1284, %v1294
        %v1298 = vmul.f32 %v1285, %v1291
        %v1299 = vmul.f32 %v1286, %v1295
        %1300 = vst [vmem:[%s179] sm:$0xff] %v1298
        %1301 = vst [vmem:[%s179 + $0x8] sm:$0xff] %v1299
        %v1302 = vld [vmem:[%s155 + $0x10] sm:$0xff]
        %v1303 = vld [vmem:[%s155 + $0x18] sm:$0xff]
        %v1304 = vmul.f32 %v1302, %v1291
        %v1305 = vmul.f32 %v1303, %v1295
        %1306 = vst [vmem:[%s179 + $0x10] sm:$0xff] %v1304
        %1307 = vst [vmem:[%s179 + $0x18] sm:$0xff] %v1305
        %s1308 = sand.u32 %s80, 1
        %s1309 = scalar_lea.sflag [#allocation8], %s1308
        %s1310 = sand.u32 %s80, 1
        %s1311 = smul.addr %s1310, 32
        %s1312 = scalar_lea.vmem [#allocation11], %s1311
        // Predicated region
        $region37: #{tpu_custom_call.1} parent=27 // pred_check
          %p1313 = pneg %p90
        $region38: #{tpu_custom_call.1} parent=27 // pred_check_branch
          %1315 = sbr.rel (%p1313) target = $region40
        $region39: #{tpu_custom_call.1} parent=27 // pred_region
          %s1317 = ssub.s32 512, 512
          %1318 = vsyncadd %s1309, %s1317
          %s1319 = smul.addr %s25, 4
          %s1320 = smul.addr %s1319, 128
          %s1321 = scalar_lea.hbm %s3, %s1320
          %s1322 = sshll.u32 %s1312, 4
          %s1323 = int_to_ptr.vmem [resolvable:$true] %s1322
          %1328 = dma.vmem_to_hbm [thread:$0]  %s1323, 512, %s1321, %s1309, 256, 256, 16
        $region40: #{tpu_custom_call.1} parent=27 // pred_fallthru
          _
      $region28: #{tpu_custom_call.1} parent=5 // pred_fallthru
        _
      %p1329 = scmp.le.s32.totalorder 2, %s20
      // Predicated region
      $region41: #{tpu_custom_call.1} parent=5 // pred_check
        %p1330 = pneg %p1329
      $region42: #{tpu_custom_call.1} parent=5 // pred_check_branch
        %1332 = sbr.rel (%p1330) target = $region44
      $region43: #{tpu_custom_call.1} parent=5 // pred_region
        %s1333 = ssub.s32 %s20, 2
        // Predicated region
        $region45: #{tpu_custom_call.1} parent=43 // pred_check
          %p1334 = pneg %p96
        $region46: #{tpu_custom_call.1} parent=43 // pred_check_branch
          %1336 = sbr.rel (%p1334) target = $region48
        $region47: #{tpu_custom_call.1} parent=43 // pred_region
          %s1337 = sand.u32 %s81, 1
          %s1338 = scalar_lea.sflag [#allocation8], %s1337
          %s1339 = sand.u32 %s81, 1
          %s1340 = smul.addr %s1339, 32
          %s1341 = scalar_lea.vmem [#allocation11], %s1340
          %1342 = dma.done %s1338, 512
        $region48: #{tpu_custom_call.1} parent=43 // pred_fallthru
          _
      $region44: #{tpu_custom_call.1} parent=5 // pred_fallthru
        _
    $region6: #{tpu_custom_call.1} parent=1 // loop_footer
      %s24 = sadd.s32 1, %s20
    $region7: #{tpu_custom_call.1} parent=1 // loop_footer_branch
      %19 = sbr.rel target = $region3
    $region8: #{tpu_custom_call.1} parent=1 // loop_exit
      _
    %1343 = vsyncpa [#allocation7], 1
    %s1344 = scalar_lea.sflag [#allocation7], 1
    %1345 = vsyncpa %s1344, 1
    %1346 = vsyncpa [#allocation10], 1
    %1347 = vsyncpa [#allocation8], 1
    %s1348 = scalar_lea.sflag [#allocation8], 1
    %1349 = vsyncpa %s1348, 1

</llo_original>
